<compile_context>
chip_gen: v7x
topology: tpu7x:2x2x1
jax: 0.10.0
libtpu: 0.0.40
codegen_flags: <defaults>
</compile_context>

<pallas_src>
import jax
import jax.numpy as jnp
from jax import lax
from jax.experimental import pallas as pl
from jax.experimental.pallas import tpu as pltpu

# ---- model configuration (small, consistent with GBM __init__) ----
D_MODEL = 32
NUM_LAYERS = 2
NUM_DIST = 4          # num_distributions
NUM_CAT = 8           # num_categories
IN_DIM = NUM_DIST * NUM_CAT   # latent_dim = num_categories * num_distributions = 32
D_INNER = 2 * D_MODEL         # inner width of the simplified Mamba block
BATCH = 2
SEQ = 8
BS = BATCH * SEQ


def _softplus(x):
    # numerically stable softplus using only exp/log/abs/max (Mosaic-friendly)
    return jnp.maximum(x, 0.0) + jnp.log(1.0 + jnp.exp(-jnp.abs(x)))


def _sigmoid(x):
    return 1.0 / (1.0 + jnp.exp(-x))


def gbm_kernel(x_ref, w1_ref, b1_ref, g_ref,
               wu_ref, bu_ref, wz_ref, bz_ref, wd_ref, bd_ref,
               a_ref, dpar_ref, wout_ref, bout_ref,
               w2_ref, b2_ref, gmat_ref, o_ref):
    x = x_ref[...]                                                     # (BS, IN_DIM), f32

    # ---- input Linear: (BS, IN_DIM) @ (IN_DIM, D_MODEL) ----
    h = jnp.dot(x, w1_ref[...], preferred_element_type=jnp.float32) + b1_ref[...]

    # ---- validity masks for the log-depth scan shifts (shared across layers) ----
    # For shift distance d, rows whose local time t < d have no in-sequence
    # predecessor: the rolled value there is replaced by the scan identity.
    t_loc = lax.broadcasted_iota(jnp.int32, (BS, D_INNER), 0) % SEQ
    shifts = []
    d = 1
    while d < SEQ:
        shifts.append((d, t_loc >= d))
        d *= 2

    # ---- stacked (simplified) Mamba layers ----
    for l in range(NUM_LAYERS):
        # RMSNorm
        var = jnp.mean(h * h, axis=-1, keepdims=True)
        xn = h * lax.rsqrt(var + 1e-6) * g_ref[l]                      # (BS, D_MODEL)

        # split in-projection: three lane-aligned (D_MODEL, D_INNER) matmuls
        u = jnp.dot(xn, wu_ref[l], preferred_element_type=jnp.float32) + bu_ref[l]
        z = jnp.dot(xn, wz_ref[l], preferred_element_type=jnp.float32) + bz_ref[l]
        dt = _softplus(
            jnp.dot(xn, wd_ref[l], preferred_element_type=jnp.float32) + bd_ref[l])
        a = a_ref[l]                                                   # exp(A_log), host-side

        # selective-scan recurrence  s_t = exp(-dt_t * a) * s_{t-1} + dt_t * u_t
        # as a Hillis–Steele associative scan with combine
        #   (A1, B1) o (A2, B2) = (A1*A2, A2*B1 + B2)
        # shift-by-d along the flattened time axis = sublane roll + identity mask.
        A = jnp.exp(-dt * a)                                           # (BS, D_INNER)
        Bv = dt * u
        for d, valid in shifts:
            A_sh = jnp.where(valid, pltpu.roll(A, shift=d, axis=0), 1.0)
            B_sh = jnp.where(valid, pltpu.roll(Bv, shift=d, axis=0), 0.0)
            Bv = A * B_sh + Bv
            A = A * A_sh
        y = Bv                                                         # state at every step

        y = (y + dpar_ref[l] * u) * (z * _sigmoid(z))                  # SiLU gate
        h = h + jnp.dot(y, wout_ref[l], preferred_element_type=jnp.float32) + bout_ref[l]

    # ---- output Linear: (BS, D_MODEL) @ (D_MODEL, IN_DIM) ----
    logits = jnp.dot(h, w2_ref[...], preferred_element_type=jnp.float32) + b2_ref[...]

    # ---- grouped softmax over each group of NUM_CAT categories ----
    # Subtracting the per-row global max is mathematically exact for softmax and
    # keeps exp bounded; the per-group sums are broadcast to every lane by one
    # matmul with a block-diagonal ones matrix (MXU otherwise idle here).
    row_max = jnp.max(logits, axis=-1, keepdims=True)
    e = jnp.exp(logits - row_max)                                      # ONE exp on the tile
    gsum = jnp.dot(e, gmat_ref[...], preferred_element_type=jnp.float32)
    o_ref[...] = (e / gsum).astype(o_ref.dtype)                        # exact normalization


def gbm_forward(x, p):
    B, S, _ = x.shape
    xf = x.reshape(B * S, IN_DIM)

    args = [xf, p['w1'], p['b1'], p['g'],
            p['win_u'], p['bin_u'], p['win_z'], p['bin_z'], p['win_dt'], p['bin_dt'],
            p['a'], p['dpar'], p['wout'], p['bout'], p['w2'], p['b2'], p['gmat']]

    vmem = pl.BlockSpec(memory_space=pltpu.MemorySpace.VMEM)
    out = pl.pallas_call(
        gbm_kernel,
        out_shape=jax.ShapeDtypeStruct((B * S, IN_DIM), jnp.float32),
        in_specs=[vmem] * len(args),
        out_specs=vmem,
    )(*args)
    return out.reshape(B, S, IN_DIM)


def init_params(key):
    ks = jax.random.split(key, 6)

    def lin(k, fan_in, shape):
        return jax.random.normal(k, shape, jnp.float32) / jnp.sqrt(float(fan_in))

    lane = jnp.arange(IN_DIM)
    gmat = (lane[:, None] // NUM_CAT == lane[None, :] // NUM_CAT).astype(jnp.float32)

    return dict(
        w1=lin(ks[0], IN_DIM, (IN_DIM, D_MODEL)),
        b1=jnp.zeros((1, D_MODEL), jnp.float32),
        g=jnp.ones((NUM_LAYERS, 1, D_MODEL), jnp.float32),
        win_u=lin(ks[1], D_MODEL, (NUM_LAYERS, D_MODEL, D_INNER)),
        bin_u=jnp.zeros((NUM_LAYERS, 1, D_INNER), jnp.float32),
        win_z=lin(ks[2], D_MODEL, (NUM_LAYERS, D_MODEL, D_INNER)),
        bin_z=jnp.zeros((NUM_LAYERS, 1, D_INNER), jnp.float32),
        win_dt=lin(ks[3], D_MODEL, (NUM_LAYERS, D_MODEL, D_INNER)),
        bin_dt=jnp.zeros((NUM_LAYERS, 1, D_INNER), jnp.float32),
        # A = exp(A_log) precomputed on the host (saves one EUP exp per layer)
        a=jnp.tile((0.1 * jnp.arange(1, D_INNER + 1, dtype=jnp.float32))[None, None, :],
                   (NUM_LAYERS, 1, 1)),
        dpar=jnp.ones((NUM_LAYERS, 1, D_INNER), jnp.float32),
        wout=lin(ks[4], D_INNER, (NUM_LAYERS, D_INNER, D_MODEL)),
        bout=jnp.zeros((NUM_LAYERS, 1, D_MODEL), jnp.float32),
        w2=lin(ks[5], D_MODEL, (D_MODEL, IN_DIM)),
        b2=jnp.zeros((1, IN_DIM), jnp.float32),
        gmat=gmat,
    )


def gbm_reference(x, p):
    """Pure-JAX reference mirroring the kernel math."""
    B, S, _ = x.shape
    h = x @ p['w1'] + p['b1']
    for l in range(NUM_LAYERS):
        var = jnp.mean(h * h, axis=-1, keepdims=True)
        xn = h * lax.rsqrt(var + 1e-6) * p['g'][l]
        u = xn @ p['win_u'][l] + p['bin_u'][l]
        z = xn @ p['win_z'][l] + p['bin_z'][l]
        dt = _softplus(xn @ p['win_dt'][l] + p['bin_dt'][l])
        a = p['a'][l]

        def step(state, inp):
            dt_t, u_t = inp
            state = jnp.exp(-dt_t * a) * state + dt_t * u_t
            return state, state

        _, ys = lax.scan(step, jnp.zeros((B, D_INNER), jnp.float32),
                         (jnp.swapaxes(dt, 0, 1), jnp.swapaxes(u, 0, 1)))
        y = jnp.swapaxes(ys, 0, 1)
        y = (y + p['dpar'][l] * u) * (z * _sigmoid(z))
        h = h + y @ p['wout'][l] + p['bout'][l]
    logits = h @ p['w2'] + p['b2']
    pr = jax.nn.softmax(logits.reshape(B, S, NUM_DIST, NUM_CAT), axis=-1)
    return pr.reshape(B, S, IN_DIM)


if __name__ == "__main__":
    key = jax.random.PRNGKey(0)
    kx, kp = jax.random.split(key)
    x = jax.random.normal(kx, (BATCH, SEQ, IN_DIM), jnp.float32)
    params = init_params(kp)

    out = gbm_forward(x, params)
    out = jax.block_until_ready(out)

    ref = gbm_reference(x, params)
    err = float(jnp.max(jnp.abs(out - ref)))
    if err > 2e-3:
        raise AssertionError(f"kernel/reference mismatch: max abs err {err}")
    # softmax groups must sum to ~1 (exact divide in the kernel)
    gsum = out.reshape(BATCH, SEQ, NUM_DIST, NUM_CAT).sum(-1)
    if float(jnp.max(jnp.abs(gsum - 1.0))) > 1e-4:
        raise AssertionError("softmax groups do not sum to 1")

    print("KERNEL_OK")
</pallas_src>

<mosaic_0001>
module attributes {stable_mosaic.version = 11 : i64} {
  func.func @gbm_kernel(%arg0: memref<16x32xf32, #tpu.memory_space<vmem>>, %arg1: memref<32x32xf32, #tpu.memory_space<vmem>>, %arg2: memref<1x32xf32, #tpu.memory_space<vmem>>, %arg3: memref<2x1x32xf32, #tpu.memory_space<vmem>>, %arg4: memref<2x32x64xf32, #tpu.memory_space<vmem>>, %arg5: memref<2x1x64xf32, #tpu.memory_space<vmem>>, %arg6: memref<2x32x64xf32, #tpu.memory_space<vmem>>, %arg7: memref<2x1x64xf32, #tpu.memory_space<vmem>>, %arg8: memref<2x32x64xf32, #tpu.memory_space<vmem>>, %arg9: memref<2x1x64xf32, #tpu.memory_space<vmem>>, %arg10: memref<2x1x64xf32, #tpu.memory_space<vmem>>, %arg11: memref<2x1x64xf32, #tpu.memory_space<vmem>>, %arg12: memref<2x64x32xf32, #tpu.memory_space<vmem>>, %arg13: memref<2x1x32xf32, #tpu.memory_space<vmem>>, %arg14: memref<32x32xf32, #tpu.memory_space<vmem>>, %arg15: memref<1x32xf32, #tpu.memory_space<vmem>>, %arg16: memref<32x32xf32, #tpu.memory_space<vmem>>, %arg17: memref<16x32xf32, #tpu.memory_space<vmem>>) attributes {dimension_semantics = [], scalar_prefetch = 0 : i64, scratch_operands = 0 : i64, tpu.core_type = #tpu.core_type<tc>} {
    %c0 = arith.constant 0 : index
    %c0_0 = arith.constant 0 : index
    %0 = vector.load %arg0[%c0, %c0_0] : memref<16x32xf32, #tpu.memory_space<vmem>>, vector<16x32xf32>
    %c0_1 = arith.constant 0 : index
    %c0_2 = arith.constant 0 : index
    %1 = vector.load %arg1[%c0_1, %c0_2] : memref<32x32xf32, #tpu.memory_space<vmem>>, vector<32x32xf32>
    %cst = arith.constant dense<0.000000e+00> : vector<16x32xf32>
    %2 = tpu.matmul %0, %1, %cst {dimension_numbers = #tpu.dot_dimension_numbers<[1], [0], [0], [1], [0, 0, 1, 1], [], []>} : vector<16x32xf32>, vector<32x32xf32>, vector<16x32xf32> -> vector<16x32xf32>
    %c0_3 = arith.constant 0 : index
    %c0_4 = arith.constant 0 : index
    %3 = vector.load %arg2[%c0_3, %c0_4] : memref<1x32xf32, #tpu.memory_space<vmem>>, vector<1x32xf32>
    %4 = vector.broadcast %3 : vector<1x32xf32> to vector<16x32xf32>
    %5 = arith.addf %2, %4 : vector<16x32xf32>
    %6 = tpu.iota {dimensions = array<i32: 0>} : vector<16x64xi32>
    %c8_i32 = arith.constant 8 : i32
    %c0_i32 = arith.constant 0 : i32
    %7 = arith.cmpi eq, %c8_i32, %c0_i32 : i32
    %c1_i32 = arith.constant 1 : i32
    %8 = arith.select %7, %c1_i32, %c8_i32 : i32
    %9 = vector.broadcast %8 : i32 to vector<16x64xi32>
    %10 = arith.remsi %6, %9 : vector<16x64xi32>
    %c0_i32_5 = arith.constant 0 : i32
    %11 = vector.broadcast %c0_i32_5 : i32 to vector<16x64xi32>
    %12 = arith.cmpi ne, %10, %11 : vector<16x64xi32>
    %c0_i32_6 = arith.constant 0 : i32
    %13 = vector.broadcast %c0_i32_6 : i32 to vector<16x64xi32>
    %14 = arith.cmpi slt, %10, %13 : vector<16x64xi32>
    %c0_i32_7 = arith.constant 0 : i32
    %15 = arith.cmpi slt, %8, %c0_i32_7 : i32
    %16 = vector.broadcast %15 : i1 to vector<16x64xi1>
    %17 = vector.broadcast %16 : vector<16x64xi1> to vector<16x64xi1>
    %18 = arith.xori %14, %17 : vector<16x64xi1>
    %19 = arith.andi %18, %12 : vector<16x64xi1>
    %20 = vector.broadcast %8 : i32 to vector<16x64xi32>
    %21 = arith.addi %10, %20 : vector<16x64xi32>
    %22 = arith.select %19, %21, %10 : vector<16x64xi1>, vector<16x64xi32>
    %c1_i32_8 = arith.constant 1 : i32
    %23 = vector.broadcast %c1_i32_8 : i32 to vector<16x64xi32>
    %24 = arith.cmpi sge, %22, %23 : vector<16x64xi32>
    %c2_i32 = arith.constant 2 : i32
    %25 = vector.broadcast %c2_i32 : i32 to vector<16x64xi32>
    %26 = arith.cmpi sge, %22, %25 : vector<16x64xi32>
    %c4_i32 = arith.constant 4 : i32
    %27 = vector.broadcast %c4_i32 : i32 to vector<16x64xi32>
    %28 = arith.cmpi sge, %22, %27 : vector<16x64xi32>
    %29 = arith.mulf %5, %5 : vector<16x32xf32>
    %cst_9 = arith.constant dense<0.000000e+00> : vector<16xf32>
    %30 = vector.multi_reduction <add>, %29, %cst_9 [1] : vector<16x32xf32> to vector<16xf32>
    %31 = vector.shape_cast %30 : vector<16xf32> to vector<16x1xf32>
    %cst_10 = arith.constant 3.200000e+01 : f32
    %32 = vector.broadcast %cst_10 : f32 to vector<16x1xf32>
    %33 = arith.divf %31, %32 : vector<16x1xf32>
    %cst_11 = arith.constant 9.99999997E-7 : f32
    %34 = vector.broadcast %cst_11 : f32 to vector<16x1xf32>
    %35 = arith.addf %33, %34 : vector<16x1xf32>
    %36 = math.rsqrt %35 : vector<16x1xf32>
    %37 = vector.broadcast %36 : vector<16x1xf32> to vector<16x32xf32>
    %38 = arith.mulf %5, %37 : vector<16x32xf32>
    %c0_12 = arith.constant 0 : index
    %c0_13 = arith.constant 0 : index
    %c0_14 = arith.constant 0 : index
    %39 = vector.load %arg3[%c0_12, %c0_13, %c0_14] : memref<2x1x32xf32, #tpu.memory_space<vmem>>, vector<1x1x32xf32>
    %40 = vector.shape_cast %39 : vector<1x1x32xf32> to vector<1x32xf32>
    %41 = vector.broadcast %40 : vector<1x32xf32> to vector<16x32xf32>
    %42 = arith.mulf %38, %41 : vector<16x32xf32>
    %c0_15 = arith.constant 0 : index
    %c0_16 = arith.constant 0 : index
    %c0_17 = arith.constant 0 : index
    %43 = vector.load %arg4[%c0_15, %c0_16, %c0_17] : memref<2x32x64xf32, #tpu.memory_space<vmem>>, vector<1x32x64xf32>
    %44 = vector.shape_cast %43 : vector<1x32x64xf32> to vector<32x64xf32>
    %cst_18 = arith.constant dense<0.000000e+00> : vector<16x64xf32>
    %45 = tpu.matmul %42, %44, %cst_18 {dimension_numbers = #tpu.dot_dimension_numbers<[1], [0], [0], [1], [0, 0, 1, 1], [], []>} : vector<16x32xf32>, vector<32x64xf32>, vector<16x64xf32> -> vector<16x64xf32>
    %c0_19 = arith.constant 0 : index
    %c0_20 = arith.constant 0 : index
    %c0_21 = arith.constant 0 : index
    %46 = vector.load %arg5[%c0_19, %c0_20, %c0_21] : memref<2x1x64xf32, #tpu.memory_space<vmem>>, vector<1x1x64xf32>
    %47 = vector.shape_cast %46 : vector<1x1x64xf32> to vector<1x64xf32>
    %48 = vector.broadcast %47 : vector<1x64xf32> to vector<16x64xf32>
    %49 = arith.addf %45, %48 : vector<16x64xf32>
    %c0_22 = arith.constant 0 : index
    %c0_23 = arith.constant 0 : index
    %c0_24 = arith.constant 0 : index
    %50 = vector.load %arg6[%c0_22, %c0_23, %c0_24] : memref<2x32x64xf32, #tpu.memory_space<vmem>>, vector<1x32x64xf32>
    %51 = vector.shape_cast %50 : vector<1x32x64xf32> to vector<32x64xf32>
    %cst_25 = arith.constant dense<0.000000e+00> : vector<16x64xf32>
    %52 = tpu.matmul %42, %51, %cst_25 {dimension_numbers = #tpu.dot_dimension_numbers<[1], [0], [0], [1], [0, 0, 1, 1], [], []>} : vector<16x32xf32>, vector<32x64xf32>, vector<16x64xf32> -> vector<16x64xf32>
    %c0_26 = arith.constant 0 : index
    %c0_27 = arith.constant 0 : index
    %c0_28 = arith.constant 0 : index
    %53 = vector.load %arg7[%c0_26, %c0_27, %c0_28] : memref<2x1x64xf32, #tpu.memory_space<vmem>>, vector<1x1x64xf32>
    %54 = vector.shape_cast %53 : vector<1x1x64xf32> to vector<1x64xf32>
    %55 = vector.broadcast %54 : vector<1x64xf32> to vector<16x64xf32>
    %56 = arith.addf %52, %55 : vector<16x64xf32>
    %c0_29 = arith.constant 0 : index
    %c0_30 = arith.constant 0 : index
    %c0_31 = arith.constant 0 : index
    %57 = vector.load %arg8[%c0_29, %c0_30, %c0_31] : memref<2x32x64xf32, #tpu.memory_space<vmem>>, vector<1x32x64xf32>
    %58 = vector.shape_cast %57 : vector<1x32x64xf32> to vector<32x64xf32>
    %cst_32 = arith.constant dense<0.000000e+00> : vector<16x64xf32>
    %59 = tpu.matmul %42, %58, %cst_32 {dimension_numbers = #tpu.dot_dimension_numbers<[1], [0], [0], [1], [0, 0, 1, 1], [], []>} : vector<16x32xf32>, vector<32x64xf32>, vector<16x64xf32> -> vector<16x64xf32>
    %c0_33 = arith.constant 0 : index
    %c0_34 = arith.constant 0 : index
    %c0_35 = arith.constant 0 : index
    %60 = vector.load %arg9[%c0_33, %c0_34, %c0_35] : memref<2x1x64xf32, #tpu.memory_space<vmem>>, vector<1x1x64xf32>
    %61 = vector.shape_cast %60 : vector<1x1x64xf32> to vector<1x64xf32>
    %62 = vector.broadcast %61 : vector<1x64xf32> to vector<16x64xf32>
    %63 = arith.addf %59, %62 : vector<16x64xf32>
    %cst_36 = arith.constant 0.000000e+00 : f32
    %64 = vector.broadcast %cst_36 : f32 to vector<16x64xf32>
    %65 = arith.maximumf %63, %64 : vector<16x64xf32>
    %66 = math.absf %63 : vector<16x64xf32>
    %cst_37 = arith.constant 0.000000e+00 : f32
    %67 = vector.broadcast %cst_37 : f32 to vector<16x64xf32>
    %68 = arith.subf %67, %66 : vector<16x64xf32>
    %69 = math.exp %68 : vector<16x64xf32>
    %cst_38 = arith.constant 1.000000e+00 : f32
    %70 = vector.broadcast %cst_38 : f32 to vector<16x64xf32>
    %71 = arith.addf %70, %69 : vector<16x64xf32>
    %72 = math.log %71 : vector<16x64xf32>
    %73 = arith.addf %65, %72 : vector<16x64xf32>
    %c0_39 = arith.constant 0 : index
    %c0_40 = arith.constant 0 : index
    %c0_41 = arith.constant 0 : index
    %74 = vector.load %arg10[%c0_39, %c0_40, %c0_41] : memref<2x1x64xf32, #tpu.memory_space<vmem>>, vector<1x1x64xf32>
    %75 = vector.shape_cast %74 : vector<1x1x64xf32> to vector<1x64xf32>
    %cst_42 = arith.constant 0.000000e+00 : f32
    %76 = vector.broadcast %cst_42 : f32 to vector<16x64xf32>
    %77 = arith.subf %76, %73 : vector<16x64xf32>
    %78 = vector.broadcast %75 : vector<1x64xf32> to vector<16x64xf32>
    %79 = arith.mulf %77, %78 : vector<16x64xf32>
    %80 = math.exp %79 : vector<16x64xf32>
    %81 = arith.mulf %73, %49 : vector<16x64xf32>
    %c1_i32_43 = arith.constant 1 : i32
    %82 = tpu.dynamic_rotate %80 by %c1_i32_43 dim 0 : vector<16x64xf32>, i32 -> vector<16x64xf32>
    %cst_44 = arith.constant 1.000000e+00 : f32
    %83 = vector.broadcast %cst_44 : f32 to vector<16x64xf32>
    %84 = arith.select %24, %82, %83 : vector<16x64xi1>, vector<16x64xf32>
    %c1_i32_45 = arith.constant 1 : i32
    %85 = tpu.dynamic_rotate %81 by %c1_i32_45 dim 0 : vector<16x64xf32>, i32 -> vector<16x64xf32>
    %cst_46 = arith.constant 0.000000e+00 : f32
    %86 = vector.broadcast %cst_46 : f32 to vector<16x64xf32>
    %87 = arith.select %24, %85, %86 : vector<16x64xi1>, vector<16x64xf32>
    %88 = arith.mulf %80, %87 : vector<16x64xf32>
    %89 = arith.addf %88, %81 : vector<16x64xf32>
    %90 = arith.mulf %80, %84 : vector<16x64xf32>
    %c2_i32_47 = arith.constant 2 : i32
    %91 = tpu.dynamic_rotate %90 by %c2_i32_47 dim 0 : vector<16x64xf32>, i32 -> vector<16x64xf32>
    %cst_48 = arith.constant 1.000000e+00 : f32
    %92 = vector.broadcast %cst_48 : f32 to vector<16x64xf32>
    %93 = arith.select %26, %91, %92 : vector<16x64xi1>, vector<16x64xf32>
    %c2_i32_49 = arith.constant 2 : i32
    %94 = tpu.dynamic_rotate %89 by %c2_i32_49 dim 0 : vector<16x64xf32>, i32 -> vector<16x64xf32>
    %cst_50 = arith.constant 0.000000e+00 : f32
    %95 = vector.broadcast %cst_50 : f32 to vector<16x64xf32>
    %96 = arith.select %26, %94, %95 : vector<16x64xi1>, vector<16x64xf32>
    %97 = arith.mulf %90, %96 : vector<16x64xf32>
    %98 = arith.addf %97, %89 : vector<16x64xf32>
    %99 = arith.mulf %90, %93 : vector<16x64xf32>
    %c4_i32_51 = arith.constant 4 : i32
    %100 = tpu.dynamic_rotate %98 by %c4_i32_51 dim 0 : vector<16x64xf32>, i32 -> vector<16x64xf32>
    %cst_52 = arith.constant 0.000000e+00 : f32
    %101 = vector.broadcast %cst_52 : f32 to vector<16x64xf32>
    %102 = arith.select %28, %100, %101 : vector<16x64xi1>, vector<16x64xf32>
    %103 = arith.mulf %99, %102 : vector<16x64xf32>
    %104 = arith.addf %103, %98 : vector<16x64xf32>
    %c0_53 = arith.constant 0 : index
    %c0_54 = arith.constant 0 : index
    %c0_55 = arith.constant 0 : index
    %105 = vector.load %arg11[%c0_53, %c0_54, %c0_55] : memref<2x1x64xf32, #tpu.memory_space<vmem>>, vector<1x1x64xf32>
    %106 = vector.shape_cast %105 : vector<1x1x64xf32> to vector<1x64xf32>
    %107 = vector.broadcast %106 : vector<1x64xf32> to vector<16x64xf32>
    %108 = arith.mulf %107, %49 : vector<16x64xf32>
    %109 = arith.addf %104, %108 : vector<16x64xf32>
    %cst_56 = arith.constant 0.000000e+00 : f32
    %110 = vector.broadcast %cst_56 : f32 to vector<16x64xf32>
    %111 = arith.subf %110, %56 : vector<16x64xf32>
    %112 = math.exp %111 : vector<16x64xf32>
    %cst_57 = arith.constant 1.000000e+00 : f32
    %113 = vector.broadcast %cst_57 : f32 to vector<16x64xf32>
    %114 = arith.addf %113, %112 : vector<16x64xf32>
    %cst_58 = arith.constant 1.000000e+00 : f32
    %115 = vector.broadcast %cst_58 : f32 to vector<16x64xf32>
    %116 = arith.divf %115, %114 : vector<16x64xf32>
    %117 = arith.mulf %56, %116 : vector<16x64xf32>
    %118 = arith.mulf %109, %117 : vector<16x64xf32>
    %c0_59 = arith.constant 0 : index
    %c0_60 = arith.constant 0 : index
    %c0_61 = arith.constant 0 : index
    %119 = vector.load %arg12[%c0_59, %c0_60, %c0_61] : memref<2x64x32xf32, #tpu.memory_space<vmem>>, vector<1x64x32xf32>
    %120 = vector.shape_cast %119 : vector<1x64x32xf32> to vector<64x32xf32>
    %cst_62 = arith.constant dense<0.000000e+00> : vector<16x32xf32>
    %121 = tpu.matmul %118, %120, %cst_62 {dimension_numbers = #tpu.dot_dimension_numbers<[1], [0], [0], [1], [0, 0, 1, 1], [], []>} : vector<16x64xf32>, vector<64x32xf32>, vector<16x32xf32> -> vector<16x32xf32>
    %122 = arith.addf %5, %121 : vector<16x32xf32>
    %c0_63 = arith.constant 0 : index
    %c0_64 = arith.constant 0 : index
    %c0_65 = arith.constant 0 : index
    %123 = vector.load %arg13[%c0_63, %c0_64, %c0_65] : memref<2x1x32xf32, #tpu.memory_space<vmem>>, vector<1x1x32xf32>
    %124 = vector.shape_cast %123 : vector<1x1x32xf32> to vector<1x32xf32>
    %125 = vector.broadcast %124 : vector<1x32xf32> to vector<16x32xf32>
    %126 = arith.addf %122, %125 : vector<16x32xf32>
    %127 = arith.mulf %126, %126 : vector<16x32xf32>
    %cst_66 = arith.constant dense<0.000000e+00> : vector<16xf32>
    %128 = vector.multi_reduction <add>, %127, %cst_66 [1] : vector<16x32xf32> to vector<16xf32>
    %129 = vector.shape_cast %128 : vector<16xf32> to vector<16x1xf32>
    %cst_67 = arith.constant 3.200000e+01 : f32
    %130 = vector.broadcast %cst_67 : f32 to vector<16x1xf32>
    %131 = arith.divf %129, %130 : vector<16x1xf32>
    %cst_68 = arith.constant 9.99999997E-7 : f32
    %132 = vector.broadcast %cst_68 : f32 to vector<16x1xf32>
    %133 = arith.addf %131, %132 : vector<16x1xf32>
    %134 = math.rsqrt %133 : vector<16x1xf32>
    %135 = vector.broadcast %134 : vector<16x1xf32> to vector<16x32xf32>
    %136 = arith.mulf %126, %135 : vector<16x32xf32>
    %c1 = arith.constant 1 : index
    %c0_69 = arith.constant 0 : index
    %c0_70 = arith.constant 0 : index
    %137 = vector.load %arg3[%c1, %c0_69, %c0_70] : memref<2x1x32xf32, #tpu.memory_space<vmem>>, vector<1x1x32xf32>
    %138 = vector.shape_cast %137 : vector<1x1x32xf32> to vector<1x32xf32>
    %139 = vector.broadcast %138 : vector<1x32xf32> to vector<16x32xf32>
    %140 = arith.mulf %136, %139 : vector<16x32xf32>
    %c1_71 = arith.constant 1 : index
    %c0_72 = arith.constant 0 : index
    %c0_73 = arith.constant 0 : index
    %141 = vector.load %arg4[%c1_71, %c0_72, %c0_73] : memref<2x32x64xf32, #tpu.memory_space<vmem>>, vector<1x32x64xf32>
    %142 = vector.shape_cast %141 : vector<1x32x64xf32> to vector<32x64xf32>
    %cst_74 = arith.constant dense<0.000000e+00> : vector<16x64xf32>
    %143 = tpu.matmul %140, %142, %cst_74 {dimension_numbers = #tpu.dot_dimension_numbers<[1], [0], [0], [1], [0, 0, 1, 1], [], []>} : vector<16x32xf32>, vector<32x64xf32>, vector<16x64xf32> -> vector<16x64xf32>
    %c1_75 = arith.constant 1 : index
    %c0_76 = arith.constant 0 : index
    %c0_77 = arith.constant 0 : index
    %144 = vector.load %arg5[%c1_75, %c0_76, %c0_77] : memref<2x1x64xf32, #tpu.memory_space<vmem>>, vector<1x1x64xf32>
    %145 = vector.shape_cast %144 : vector<1x1x64xf32> to vector<1x64xf32>
    %146 = vector.broadcast %145 : vector<1x64xf32> to vector<16x64xf32>
    %147 = arith.addf %143, %146 : vector<16x64xf32>
    %c1_78 = arith.constant 1 : index
    %c0_79 = arith.constant 0 : index
    %c0_80 = arith.constant 0 : index
    %148 = vector.load %arg6[%c1_78, %c0_79, %c0_80] : memref<2x32x64xf32, #tpu.memory_space<vmem>>, vector<1x32x64xf32>
    %149 = vector.shape_cast %148 : vector<1x32x64xf32> to vector<32x64xf32>
    %cst_81 = arith.constant dense<0.000000e+00> : vector<16x64xf32>
    %150 = tpu.matmul %140, %149, %cst_81 {dimension_numbers = #tpu.dot_dimension_numbers<[1], [0], [0], [1], [0, 0, 1, 1], [], []>} : vector<16x32xf32>, vector<32x64xf32>, vector<16x64xf32> -> vector<16x64xf32>
    %c1_82 = arith.constant 1 : index
    %c0_83 = arith.constant 0 : index
    %c0_84 = arith.constant 0 : index
    %151 = vector.load %arg7[%c1_82, %c0_83, %c0_84] : memref<2x1x64xf32, #tpu.memory_space<vmem>>, vector<1x1x64xf32>
    %152 = vector.shape_cast %151 : vector<1x1x64xf32> to vector<1x64xf32>
    %153 = vector.broadcast %152 : vector<1x64xf32> to vector<16x64xf32>
    %154 = arith.addf %150, %153 : vector<16x64xf32>
    %c1_85 = arith.constant 1 : index
    %c0_86 = arith.constant 0 : index
    %c0_87 = arith.constant 0 : index
    %155 = vector.load %arg8[%c1_85, %c0_86, %c0_87] : memref<2x32x64xf32, #tpu.memory_space<vmem>>, vector<1x32x64xf32>
    %156 = vector.shape_cast %155 : vector<1x32x64xf32> to vector<32x64xf32>
    %cst_88 = arith.constant dense<0.000000e+00> : vector<16x64xf32>
    %157 = tpu.matmul %140, %156, %cst_88 {dimension_numbers = #tpu.dot_dimension_numbers<[1], [0], [0], [1], [0, 0, 1, 1], [], []>} : vector<16x32xf32>, vector<32x64xf32>, vector<16x64xf32> -> vector<16x64xf32>
    %c1_89 = arith.constant 1 : index
    %c0_90 = arith.constant 0 : index
    %c0_91 = arith.constant 0 : index
    %158 = vector.load %arg9[%c1_89, %c0_90, %c0_91] : memref<2x1x64xf32, #tpu.memory_space<vmem>>, vector<1x1x64xf32>
    %159 = vector.shape_cast %158 : vector<1x1x64xf32> to vector<1x64xf32>
    %160 = vector.broadcast %159 : vector<1x64xf32> to vector<16x64xf32>
    %161 = arith.addf %157, %160 : vector<16x64xf32>
    %cst_92 = arith.constant 0.000000e+00 : f32
    %162 = vector.broadcast %cst_92 : f32 to vector<16x64xf32>
    %163 = arith.maximumf %161, %162 : vector<16x64xf32>
    %164 = math.absf %161 : vector<16x64xf32>
    %cst_93 = arith.constant 0.000000e+00 : f32
    %165 = vector.broadcast %cst_93 : f32 to vector<16x64xf32>
    %166 = arith.subf %165, %164 : vector<16x64xf32>
    %167 = math.exp %166 : vector<16x64xf32>
    %cst_94 = arith.constant 1.000000e+00 : f32
    %168 = vector.broadcast %cst_94 : f32 to vector<16x64xf32>
    %169 = arith.addf %168, %167 : vector<16x64xf32>
    %170 = math.log %169 : vector<16x64xf32>
    %171 = arith.addf %163, %170 : vector<16x64xf32>
    %c1_95 = arith.constant 1 : index
    %c0_96 = arith.constant 0 : index
    %c0_97 = arith.constant 0 : index
    %172 = vector.load %arg10[%c1_95, %c0_96, %c0_97] : memref<2x1x64xf32, #tpu.memory_space<vmem>>, vector<1x1x64xf32>
    %173 = vector.shape_cast %172 : vector<1x1x64xf32> to vector<1x64xf32>
    %cst_98 = arith.constant 0.000000e+00 : f32
    %174 = vector.broadcast %cst_98 : f32 to vector<16x64xf32>
    %175 = arith.subf %174, %171 : vector<16x64xf32>
    %176 = vector.broadcast %173 : vector<1x64xf32> to vector<16x64xf32>
    %177 = arith.mulf %175, %176 : vector<16x64xf32>
    %178 = math.exp %177 : vector<16x64xf32>
    %179 = arith.mulf %171, %147 : vector<16x64xf32>
    %c1_i32_99 = arith.constant 1 : i32
    %180 = tpu.dynamic_rotate %178 by %c1_i32_99 dim 0 : vector<16x64xf32>, i32 -> vector<16x64xf32>
    %cst_100 = arith.constant 1.000000e+00 : f32
    %181 = vector.broadcast %cst_100 : f32 to vector<16x64xf32>
    %182 = arith.select %24, %180, %181 : vector<16x64xi1>, vector<16x64xf32>
    %c1_i32_101 = arith.constant 1 : i32
    %183 = tpu.dynamic_rotate %179 by %c1_i32_101 dim 0 : vector<16x64xf32>, i32 -> vector<16x64xf32>
    %cst_102 = arith.constant 0.000000e+00 : f32
    %184 = vector.broadcast %cst_102 : f32 to vector<16x64xf32>
    %185 = arith.select %24, %183, %184 : vector<16x64xi1>, vector<16x64xf32>
    %186 = arith.mulf %178, %185 : vector<16x64xf32>
    %187 = arith.addf %186, %179 : vector<16x64xf32>
    %188 = arith.mulf %178, %182 : vector<16x64xf32>
    %c2_i32_103 = arith.constant 2 : i32
    %189 = tpu.dynamic_rotate %188 by %c2_i32_103 dim 0 : vector<16x64xf32>, i32 -> vector<16x64xf32>
    %cst_104 = arith.constant 1.000000e+00 : f32
    %190 = vector.broadcast %cst_104 : f32 to vector<16x64xf32>
    %191 = arith.select %26, %189, %190 : vector<16x64xi1>, vector<16x64xf32>
    %c2_i32_105 = arith.constant 2 : i32
    %192 = tpu.dynamic_rotate %187 by %c2_i32_105 dim 0 : vector<16x64xf32>, i32 -> vector<16x64xf32>
    %cst_106 = arith.constant 0.000000e+00 : f32
    %193 = vector.broadcast %cst_106 : f32 to vector<16x64xf32>
    %194 = arith.select %26, %192, %193 : vector<16x64xi1>, vector<16x64xf32>
    %195 = arith.mulf %188, %194 : vector<16x64xf32>
    %196 = arith.addf %195, %187 : vector<16x64xf32>
    %197 = arith.mulf %188, %191 : vector<16x64xf32>
    %c4_i32_107 = arith.constant 4 : i32
    %198 = tpu.dynamic_rotate %196 by %c4_i32_107 dim 0 : vector<16x64xf32>, i32 -> vector<16x64xf32>
    %cst_108 = arith.constant 0.000000e+00 : f32
    %199 = vector.broadcast %cst_108 : f32 to vector<16x64xf32>
    %200 = arith.select %28, %198, %199 : vector<16x64xi1>, vector<16x64xf32>
    %201 = arith.mulf %197, %200 : vector<16x64xf32>
    %202 = arith.addf %201, %196 : vector<16x64xf32>
    %c1_109 = arith.constant 1 : index
    %c0_110 = arith.constant 0 : index
    %c0_111 = arith.constant 0 : index
    %203 = vector.load %arg11[%c1_109, %c0_110, %c0_111] : memref<2x1x64xf32, #tpu.memory_space<vmem>>, vector<1x1x64xf32>
    %204 = vector.shape_cast %203 : vector<1x1x64xf32> to vector<1x64xf32>
    %205 = vector.broadcast %204 : vector<1x64xf32> to vector<16x64xf32>
    %206 = arith.mulf %205, %147 : vector<16x64xf32>
    %207 = arith.addf %202, %206 : vector<16x64xf32>
    %cst_112 = arith.constant 0.000000e+00 : f32
    %208 = vector.broadcast %cst_112 : f32 to vector<16x64xf32>
    %209 = arith.subf %208, %154 : vector<16x64xf32>
    %210 = math.exp %209 : vector<16x64xf32>
    %cst_113 = arith.constant 1.000000e+00 : f32
    %211 = vector.broadcast %cst_113 : f32 to vector<16x64xf32>
    %212 = arith.addf %211, %210 : vector<16x64xf32>
    %cst_114 = arith.constant 1.000000e+00 : f32
    %213 = vector.broadcast %cst_114 : f32 to vector<16x64xf32>
    %214 = arith.divf %213, %212 : vector<16x64xf32>
    %215 = arith.mulf %154, %214 : vector<16x64xf32>
    %216 = arith.mulf %207, %215 : vector<16x64xf32>
    %c1_115 = arith.constant 1 : index
    %c0_116 = arith.constant 0 : index
    %c0_117 = arith.constant 0 : index
    %217 = vector.load %arg12[%c1_115, %c0_116, %c0_117] : memref<2x64x32xf32, #tpu.memory_space<vmem>>, vector<1x64x32xf32>
    %218 = vector.shape_cast %217 : vector<1x64x32xf32> to vector<64x32xf32>
    %cst_118 = arith.constant dense<0.000000e+00> : vector<16x32xf32>
    %219 = tpu.matmul %216, %218, %cst_118 {dimension_numbers = #tpu.dot_dimension_numbers<[1], [0], [0], [1], [0, 0, 1, 1], [], []>} : vector<16x64xf32>, vector<64x32xf32>, vector<16x32xf32> -> vector<16x32xf32>
    %220 = arith.addf %126, %219 : vector<16x32xf32>
    %c1_119 = arith.constant 1 : index
    %c0_120 = arith.constant 0 : index
    %c0_121 = arith.constant 0 : index
    %221 = vector.load %arg13[%c1_119, %c0_120, %c0_121] : memref<2x1x32xf32, #tpu.memory_space<vmem>>, vector<1x1x32xf32>
    %222 = vector.shape_cast %221 : vector<1x1x32xf32> to vector<1x32xf32>
    %223 = vector.broadcast %222 : vector<1x32xf32> to vector<16x32xf32>
    %224 = arith.addf %220, %223 : vector<16x32xf32>
    %c0_122 = arith.constant 0 : index
    %c0_123 = arith.constant 0 : index
    %225 = vector.load %arg14[%c0_122, %c0_123] : memref<32x32xf32, #tpu.memory_space<vmem>>, vector<32x32xf32>
    %cst_124 = arith.constant dense<0.000000e+00> : vector<16x32xf32>
    %226 = tpu.matmul %224, %225, %cst_124 {dimension_numbers = #tpu.dot_dimension_numbers<[1], [0], [0], [1], [0, 0, 1, 1], [], []>} : vector<16x32xf32>, vector<32x32xf32>, vector<16x32xf32> -> vector<16x32xf32>
    %c0_125 = arith.constant 0 : index
    %c0_126 = arith.constant 0 : index
    %227 = vector.load %arg15[%c0_125, %c0_126] : memref<1x32xf32, #tpu.memory_space<vmem>>, vector<1x32xf32>
    %228 = vector.broadcast %227 : vector<1x32xf32> to vector<16x32xf32>
    %229 = arith.addf %226, %228 : vector<16x32xf32>
    %cst_127 = arith.constant dense<0xFF800000> : vector<16xf32>
    %230 = vector.multi_reduction <maximumf>, %229, %cst_127 [1] : vector<16x32xf32> to vector<16xf32>
    %231 = vector.shape_cast %230 : vector<16xf32> to vector<16x1xf32>
    %232 = vector.broadcast %231 : vector<16x1xf32> to vector<16x32xf32>
    %233 = arith.subf %229, %232 : vector<16x32xf32>
    %234 = math.exp %233 : vector<16x32xf32>
    %c0_128 = arith.constant 0 : index
    %c0_129 = arith.constant 0 : index
    %235 = vector.load %arg16[%c0_128, %c0_129] : memref<32x32xf32, #tpu.memory_space<vmem>>, vector<32x32xf32>
    %cst_130 = arith.constant dense<0.000000e+00> : vector<16x32xf32>
    %236 = tpu.matmul %234, %235, %cst_130 {dimension_numbers = #tpu.dot_dimension_numbers<[1], [0], [0], [1], [0, 0, 1, 1], [], []>} : vector<16x32xf32>, vector<32x32xf32>, vector<16x32xf32> -> vector<16x32xf32>
    %237 = arith.divf %234, %236 : vector<16x32xf32>
    %c0_131 = arith.constant 0 : index
    %c0_132 = arith.constant 0 : index
    %238 = vector.load %arg17[%c0_131, %c0_132] : memref<16x32xf32, #tpu.memory_space<vmem>>, vector<16x32xf32>
    tpu.vector_store %arg17[%c0_131, %c0_132], %237 {strides = array<i32>} : memref<16x32xf32, #tpu.memory_space<vmem>>, vector<16x32xf32>,
    return
  }
}

</mosaic_0001>

<llo_original>
// kernel: tpu_custom_call.1
$region0: #{tpu_custom_call.1}
  #allocation0 [shape = 'u32[]', space=smem, size = 0x4, offset = 0x4, fixed_abs, tag = 'smem constant byte address 0x4 - core index']
  #allocation1 [shape = 'u32[144,128]{1,0:T(1,128)}', space=vmem, size = 0x12000, scoped, tag = 'internal scratch']
  %s0 = inlined_call_operand.hbm [shape: f32[16,32], index: 0, kind: input, shape index: {}]
  %s1 = inlined_call_operand.hbm [shape: f32[32,32], index: 1, kind: input, shape index: {}]
  %s2 = inlined_call_operand.hbm [shape: f32[1,32], index: 2, kind: input, shape index: {}]
  %s3 = inlined_call_operand.vmem [shape: f32[2,1,32], index: 3, kind: input, shape index: {}]
  %s4 = inlined_call_operand.vmem [shape: f32[2,32,64], index: 4, kind: input, shape index: {}]
  %s5 = inlined_call_operand.hbm [shape: f32[2,1,64], index: 5, kind: input, shape index: {}]
  %s6 = inlined_call_operand.vmem [shape: f32[2,32,64], index: 6, kind: input, shape index: {}]
  %s7 = inlined_call_operand.hbm [shape: f32[2,1,64], index: 7, kind: input, shape index: {}]
  %s8 = inlined_call_operand.vmem [shape: f32[2,32,64], index: 8, kind: input, shape index: {}]
  %s9 = inlined_call_operand.hbm [shape: f32[2,1,64], index: 9, kind: input, shape index: {}]
  %s10 = inlined_call_operand.vmem [shape: f32[2,1,64], index: 10, kind: input, shape index: {}]
  %s11 = inlined_call_operand.vmem [shape: f32[2,1,64], index: 11, kind: input, shape index: {}]
  %s12 = inlined_call_operand.vmem [shape: f32[2,64,32], index: 12, kind: input, shape index: {}]
  %s13 = inlined_call_operand.vmem [shape: f32[2,1,32], index: 13, kind: input, shape index: {}]
  %s14 = inlined_call_operand.vmem [shape: f32[32,32], index: 14, kind: input, shape index: {}]
  %s15 = inlined_call_operand.vmem [shape: f32[1,32], index: 15, kind: input, shape index: {}]
  %s16 = inlined_call_operand.hbm [shape: f32[32,32], index: 16, kind: input, shape index: {}]
  %s17 = inlined_call_operand.hbm [shape: f32[16,32], index: 17, kind: output, shape index: {}]
  %s18 = sld [smem:[#allocation0]]
  $region106: #{tpu_custom_call.1} parent=0
    _
  %s20 = ssub.s32 1, %s18
  %s21 = scalar_select 0, %s20, %s18
  $region1: #{tpu_custom_call.1} parent=0
    #allocation2 [shape = 'u8[8192]{0}', space=vmem, size = 0x2000, scoped, tag = 'input window, operand 0, single buffered']
    #allocation3 [shape = 's32[1]{0}', space=sflag, size = 0x4, scoped, tag = 'scoped memory for tpu_custom_call.1']
    #allocation4 [shape = 's32[1]{0}', space=sflag, size = 0x4, scoped, tag = 'scoped memory for tpu_custom_call.1']
    #allocation5 [shape = 'u8[16384]{0}', space=vmem, size = 0x4000, scoped, tag = 'input window, operand 1, single buffered']
    #allocation6 [shape = 's32[1]{0}', space=sflag, size = 0x4, scoped, tag = 'scoped memory for tpu_custom_call.1']
    #allocation7 [shape = 'u8[512]{0}', space=vmem, size = 0x400, scoped, tag = 'input window, operand 2, single buffered']
    #allocation8 [shape = 'u8[1024]{0}', space=vmem, size = 0x400, scoped, tag = 'input window, operand 5, single buffered']
    #allocation9 [shape = 's32[1]{0}', space=sflag, size = 0x4, scoped, tag = 'scoped memory for tpu_custom_call.1']
    #allocation10 [shape = 'u8[1024]{0}', space=vmem, size = 0x400, scoped, tag = 'input window, operand 7, single buffered']
    #allocation11 [shape = 'u8[1024]{0}', space=vmem, size = 0x400, scoped, tag = 'input window, operand 9, single buffered']
    #allocation12 [shape = 's32[1]{0}', space=sflag, size = 0x4, scoped, tag = 'scoped memory for tpu_custom_call.1']
    #allocation13 [shape = 'u8[16384]{0}', space=vmem, size = 0x4000, scoped, tag = 'input window, operand 16, single buffered']
    #allocation14 [shape = 'u8[8192]{0}', space=vmem, size = 0x2000, scoped, tag = 'output window, operand 0, single buffered']
    %22 = vsyncpa [#allocation3], 0
    %23 = vsyncpa [#allocation6], 0
    %24 = vsyncpa [#allocation9], 0
    %25 = vsyncpa [#allocation12], 0
    %26 = vsyncpa [#allocation4], 0
    // Predicated region
    $region2: #{tpu_custom_call.1} parent=1 // pred_check
      _
    $region3: #{tpu_custom_call.1} parent=1 // pred_check_branch
      %28 = sbr.rel (0) target = $region5
    $region4: #{tpu_custom_call.1} parent=1 // pred_region
      %s30 = ssub.s32 256, 256
      %31 = vsyncadd [#allocation3], %s30
      %s32 = sshll.u32 [#allocation2], 4
      %s33 = int_to_ptr.vmem [resolvable:$true] %s32
      %38 = dma.hbm_to_vmem [thread:$0]  %s0, 256, %s33, [#allocation3], 128, 128, 8
    $region5: #{tpu_custom_call.1} parent=1 // pred_fallthru
      _
    // Predicated region
    $region6: #{tpu_custom_call.1} parent=1 // pred_check
      _
    $region7: #{tpu_custom_call.1} parent=1 // pred_check_branch
      %40 = sbr.rel (0) target = $region9
    $region8: #{tpu_custom_call.1} parent=1 // pred_region
      %s42 = ssub.s32 512, 512
      %43 = vsyncadd [#allocation6], %s42
      %s44 = sshll.u32 [#allocation5], 4
      %s45 = int_to_ptr.vmem [resolvable:$true] %s44
      %50 = dma.hbm_to_vmem [thread:$0]  %s1, 512, %s45, [#allocation6], 128, 128, 8
    $region9: #{tpu_custom_call.1} parent=1 // pred_fallthru
      _
    // Predicated region
    $region10: #{tpu_custom_call.1} parent=1 // pred_check
      _
    $region11: #{tpu_custom_call.1} parent=1 // pred_check_branch
      %52 = sbr.rel (0) target = $region13
    $region12: #{tpu_custom_call.1} parent=1 // pred_region
      %s54 = ssub.s32 16, 16
      %55 = vsyncadd [#allocation6], %s54
      %s57 = sshll.u32 [#allocation7], 4
      %s58 = int_to_ptr.vmem [resolvable:$true] %s57
      %60 = dma.hbm_to_vmem [thread:$0]  %s2, 16, %s58, [#allocation6]
    $region13: #{tpu_custom_call.1} parent=1 // pred_fallthru
      _
    // Predicated region
    $region14: #{tpu_custom_call.1} parent=1 // pred_check
      _
    $region15: #{tpu_custom_call.1} parent=1 // pred_check_branch
      %62 = sbr.rel (0) target = $region17
    $region16: #{tpu_custom_call.1} parent=1 // pred_region
      _
    $region17: #{tpu_custom_call.1} parent=1 // pred_fallthru
      _
    // Predicated region
    $region18: #{tpu_custom_call.1} parent=1 // pred_check
      _
    $region19: #{tpu_custom_call.1} parent=1 // pred_check_branch
      %64 = sbr.rel (0) target = $region21
    $region20: #{tpu_custom_call.1} parent=1 // pred_region
      _
    $region21: #{tpu_custom_call.1} parent=1 // pred_fallthru
      _
    // Predicated region
    $region22: #{tpu_custom_call.1} parent=1 // pred_check
      _
    $region23: #{tpu_custom_call.1} parent=1 // pred_check_branch
      %66 = sbr.rel (0) target = $region25
    $region24: #{tpu_custom_call.1} parent=1 // pred_region
      %s68 = ssub.s32 32, 32
      %69 = vsyncadd [#allocation9], %s68
      %s70 = sshll.u32 [#allocation8], 4
      %s71 = int_to_ptr.vmem [resolvable:$true] %s70
      %76 = dma.hbm_to_vmem [thread:$0]  %s5, 32, %s71, [#allocation9], 16, 16, 1
    $region25: #{tpu_custom_call.1} parent=1 // pred_fallthru
      _
    // Predicated region
    $region26: #{tpu_custom_call.1} parent=1 // pred_check
      _
    $region27: #{tpu_custom_call.1} parent=1 // pred_check_branch
      %78 = sbr.rel (0) target = $region29
    $region28: #{tpu_custom_call.1} parent=1 // pred_region
      _
    $region29: #{tpu_custom_call.1} parent=1 // pred_fallthru
      _
    // Predicated region
    $region30: #{tpu_custom_call.1} parent=1 // pred_check
      _
    $region31: #{tpu_custom_call.1} parent=1 // pred_check_branch
      %80 = sbr.rel (0) target = $region33
    $region32: #{tpu_custom_call.1} parent=1 // pred_region
      %s82 = ssub.s32 32, 32
      %83 = vsyncadd [#allocation9], %s82
      %s84 = sshll.u32 [#allocation10], 4
      %s85 = int_to_ptr.vmem [resolvable:$true] %s84
      %90 = dma.hbm_to_vmem [thread:$0]  %s7, 32, %s85, [#allocation9], 16, 16, 1
    $region33: #{tpu_custom_call.1} parent=1 // pred_fallthru
      _
    // Predicated region
    $region34: #{tpu_custom_call.1} parent=1 // pred_check
      _
    $region35: #{tpu_custom_call.1} parent=1 // pred_check_branch
      %92 = sbr.rel (0) target = $region37
    $region36: #{tpu_custom_call.1} parent=1 // pred_region
      _
    $region37: #{tpu_custom_call.1} parent=1 // pred_fallthru
      _
    // Predicated region
    $region38: #{tpu_custom_call.1} parent=1 // pred_check
      _
    $region39: #{tpu_custom_call.1} parent=1 // pred_check_branch
      %94 = sbr.rel (0) target = $region41
    $region40: #{tpu_custom_call.1} parent=1 // pred_region
      %s96 = ssub.s32 32, 32
      %97 = vsyncadd [#allocation12], %s96
      %s98 = sshll.u32 [#allocation11], 4
      %s99 = int_to_ptr.vmem [resolvable:$true] %s98
      %104 = dma.hbm_to_vmem [thread:$0]  %s9, 32, %s99, [#allocation12], 16, 16, 1
    $region41: #{tpu_custom_call.1} parent=1 // pred_fallthru
      _
    // Predicated region
    $region42: #{tpu_custom_call.1} parent=1 // pred_check
      _
    $region43: #{tpu_custom_call.1} parent=1 // pred_check_branch
      %106 = sbr.rel (0) target = $region45
    $region44: #{tpu_custom_call.1} parent=1 // pred_region
      _
    $region45: #{tpu_custom_call.1} parent=1 // pred_fallthru
      _
    // Predicated region
    $region46: #{tpu_custom_call.1} parent=1 // pred_check
      _
    $region47: #{tpu_custom_call.1} parent=1 // pred_check_branch
      %108 = sbr.rel (0) target = $region49
    $region48: #{tpu_custom_call.1} parent=1 // pred_region
      _
    $region49: #{tpu_custom_call.1} parent=1 // pred_fallthru
      _
    // Predicated region
    $region50: #{tpu_custom_call.1} parent=1 // pred_check
      _
    $region51: #{tpu_custom_call.1} parent=1 // pred_check_branch
      %110 = sbr.rel (0) target = $region53
    $region52: #{tpu_custom_call.1} parent=1 // pred_region
      _
    $region53: #{tpu_custom_call.1} parent=1 // pred_fallthru
      _
    // Predicated region
    $region54: #{tpu_custom_call.1} parent=1 // pred_check
      _
    $region55: #{tpu_custom_call.1} parent=1 // pred_check_branch
      %112 = sbr.rel (0) target = $region57
    $region56: #{tpu_custom_call.1} parent=1 // pred_region
      _
    $region57: #{tpu_custom_call.1} parent=1 // pred_fallthru
      _
    // Predicated region
    $region58: #{tpu_custom_call.1} parent=1 // pred_check
      _
    $region59: #{tpu_custom_call.1} parent=1 // pred_check_branch
      %114 = sbr.rel (0) target = $region61
    $region60: #{tpu_custom_call.1} parent=1 // pred_region
      _
    $region61: #{tpu_custom_call.1} parent=1 // pred_fallthru
      _
    // Predicated region
    $region62: #{tpu_custom_call.1} parent=1 // pred_check
      _
    $region63: #{tpu_custom_call.1} parent=1 // pred_check_branch
      %116 = sbr.rel (0) target = $region65
    $region64: #{tpu_custom_call.1} parent=1 // pred_region
      _
    $region65: #{tpu_custom_call.1} parent=1 // pred_fallthru
      _
    // Predicated region
    $region66: #{tpu_custom_call.1} parent=1 // pred_check
      _
    $region67: #{tpu_custom_call.1} parent=1 // pred_check_branch
      %118 = sbr.rel (0) target = $region69
    $region68: #{tpu_custom_call.1} parent=1 // pred_region
      %s120 = ssub.s32 512, 512
      %121 = vsyncadd [#allocation12], %s120
      %s122 = sshll.u32 [#allocation13], 4
      %s123 = int_to_ptr.vmem [resolvable:$true] %s122
      %128 = dma.hbm_to_vmem [thread:$0]  %s16, 512, %s123, [#allocation12], 128, 128, 8
    $region69: #{tpu_custom_call.1} parent=1 // pred_fallthru
      _
    // Predicated region
    $region70: #{tpu_custom_call.1} parent=1 // pred_check
      _
    $region71: #{tpu_custom_call.1} parent=1 // pred_check_branch
      %130 = sbr.rel (0) target = $region73
    $region72: #{tpu_custom_call.1} parent=1 // pred_region
      %131 = dma.done [#allocation3], 256
    $region73: #{tpu_custom_call.1} parent=1 // pred_fallthru
      _
    // Predicated region
    $region74: #{tpu_custom_call.1} parent=1 // pred_check
      _
    $region75: #{tpu_custom_call.1} parent=1 // pred_check_branch
      %133 = sbr.rel (0) target = $region77
    $region76: #{tpu_custom_call.1} parent=1 // pred_region
      %134 = dma.done [#allocation6], 512
    $region77: #{tpu_custom_call.1} parent=1 // pred_fallthru
      _
    // Predicated region
    $region78: #{tpu_custom_call.1} parent=1 // pred_check
      _
    $region79: #{tpu_custom_call.1} parent=1 // pred_check_branch
      %136 = sbr.rel (0) target = $region81
    $region80: #{tpu_custom_call.1} parent=1 // pred_region
      %137 = dma.done [#allocation6], 16
    $region81: #{tpu_custom_call.1} parent=1 // pred_fallthru
      _
    // Predicated region
    $region82: #{tpu_custom_call.1} parent=1 // pred_check
      _
    $region83: #{tpu_custom_call.1} parent=1 // pred_check_branch
      %139 = sbr.rel (0) target = $region85
    $region84: #{tpu_custom_call.1} parent=1 // pred_region
      %140 = dma.done [#allocation9], 32
    $region85: #{tpu_custom_call.1} parent=1 // pred_fallthru
      _
    // Predicated region
    $region86: #{tpu_custom_call.1} parent=1 // pred_check
      _
    $region87: #{tpu_custom_call.1} parent=1 // pred_check_branch
      %142 = sbr.rel (0) target = $region89
    $region88: #{tpu_custom_call.1} parent=1 // pred_region
      %143 = dma.done [#allocation9], 32
    $region89: #{tpu_custom_call.1} parent=1 // pred_fallthru
      _
    // Predicated region
    $region90: #{tpu_custom_call.1} parent=1 // pred_check
      _
    $region91: #{tpu_custom_call.1} parent=1 // pred_check_branch
      %145 = sbr.rel (0) target = $region93
    $region92: #{tpu_custom_call.1} parent=1 // pred_region
      %146 = dma.done [#allocation12], 32
    $region93: #{tpu_custom_call.1} parent=1 // pred_fallthru
      _
    // Predicated region
    $region94: #{tpu_custom_call.1} parent=1 // pred_check
      _
    $region95: #{tpu_custom_call.1} parent=1 // pred_check_branch
      %148 = sbr.rel (0) target = $region97
    $region96: #{tpu_custom_call.1} parent=1 // pred_region
      %149 = dma.done [#allocation12], 512
    $region97: #{tpu_custom_call.1} parent=1 // pred_fallthru
      _
    %v150 = vld [vmem:[#allocation2] sm:$0xff]
    %v151 = vld [vmem:[#allocation2 + $0x8] sm:$0xff]
    %v152 = vld [vmem:[#allocation5] sm:$0xff]
    %v153 = vld [vmem:[#allocation5 + $0x8] sm:$0xff]
    %v154 = vld [vmem:[#allocation5 + $0x10] sm:$0xff]
    %v155 = vld [vmem:[#allocation5 + $0x18] sm:$0xff]
    %v156 = vld [vmem:[#allocation7] sm:$0x1]
    %v158 = vlaneseq
    %v159 = vshrl.u32 %v158, 7
    %v160 = vsub.s32 0, %v159
    %v161 = vrot.slane %v156, %v160
    %vm163 = vcmask 261120
    %v165 = vsel %vm163, %v150, 0
    %v168 = vsel %vm163, %v151, 0
    %170 = vmatprep.subr.mxu0 0.0
    %171 = vmatpush1.msra.mxu0 %v152
    %172 = vmatprep.subr.mxu0 0.0
    %173 = vmatpush1.msra.mxu0 %v153
    %174 = vmatprep.subr.mxu0 0.0
    %175 = vmatpush1.msra.mxu0 %v154
    %176 = vmatprep.subr.mxu0 0.0
    %177 = vmatpush1.msra.mxu0 %v155
    %178 = vmatprep.subr.mxu0 0.0
    %179 = vmatpush1.msra.mxu0 0.0
    %180 = vmatprep.subr.mxu0 0.0
    %181 = vmatpush1.msra.mxu0 0.0
    %182 = vmatprep.subr.mxu0 0.0
    %183 = vmatpush1.msra.mxu0 0.0
    %184 = vmatprep.subr.mxu0 0.0
    %185 = vmatpush1.msra.mxu0 0.0
    %186 = vmatprep.subr.mxu0 0.0
    %187 = vmatpush1.msra.mxu0 0.0
    %188 = vmatprep.subr.mxu0 0.0
    %189 = vmatpush1.msra.mxu0 0.0
    %190 = vmatprep.subr.mxu0 0.0
    %191 = vmatpush1.msra.mxu0 0.0
    %192 = vmatprep.subr.mxu0 0.0
    %193 = vmatpush1.msra.mxu0 0.0
    %194 = vmatprep.subr.mxu0 0.0
    %195 = vmatpush1.msra.mxu0 0.0
    %196 = vmatprep.subr.mxu0 0.0
    %197 = vmatpush1.msra.mxu0 0.0
    %198 = vmatprep.subr.mxu0 0.0
    %199 = vmatpush1.msra.mxu0 0.0
    %200 = vmatprep.subr.mxu0 0.0
    %201 = vmatpush1.msra.mxu0 0.0
    %202 = vmatprep.subr.mxu0 0.0
    %203 = vmatpush1.msra.mxu0 0.0
    %204 = vmatprep.subr.mxu0 0.0
    %205 = vmatpush1.msra.mxu0 0.0
    %206 = vmatprep.subr.mxu0 0.0
    %207 = vmatpush1.msra.mxu0 0.0
    %208 = vmatprep.subr.mxu0 0.0
    %209 = vmatpush1.msra.mxu0 0.0
    %210 = vmatprep.subr.mxu0 0.0
    %211 = vmatpush1.msra.mxu0 0.0
    %212 = vmatprep.subr.mxu0 0.0
    %213 = vmatpush1.msra.mxu0 0.0
    %214 = vmatprep.subr.mxu0 0.0
    %215 = vmatpush1.msra.mxu0 0.0
    %216 = vmatprep.subr.mxu0 0.0
    %217 = vmatpush1.msra.mxu0 0.0
    %218 = vmatprep.subr.mxu0 0.0
    %219 = vmatpush1.msra.mxu0 0.0
    %220 = vmatprep.subr.mxu0 0.0
    %221 = vmatpush1.msra.mxu0 0.0
    %222 = vmatprep.subr.mxu0 0.0
    %223 = vmatpush1.msra.mxu0 0.0
    %224 = vmatprep.subr.mxu0 0.0
    %225 = vmatpush1.msra.mxu0 0.0
    %226 = vmatprep.subr.mxu0 0.0
    %227 = vmatpush1.msra.mxu0 0.0
    %228 = vmatprep.subr.mxu0 0.0
    %229 = vmatpush1.msra.mxu0 0.0
    %230 = vmatprep.subr.mxu0 0.0
    %231 = vmatpush1.msra.mxu0 0.0
    %232 = vmatprep.subr.mxu0 0.0
    %233 = vmatpush1.msra.mxu0 0.0
    %234 = vmatprep.mubr.f32.mxu0 0.0
    %235 = vmatmul.mubr.f32.gmra.mrb[0].mxu0 %v165
    %v236 = vpop.f32.mrb[0].mxu0
    %v237 = vadd.f32 %v161, %v236
    %v238 = vpop.f32.mrb[0].mxu0
    %239 = vmatprep.mubr.f32.mxu0 0.0
    %240 = vmatmul.mubr.f32.gmra.mrb[0].mxu0 %v168
    %v241 = vpop.f32.mrb[0].mxu0
    %v242 = vadd.f32 %v161, %v241
    %v243 = vpop.f32.mrb[0].mxu0
    %244 = vdwg.mxu0
    %v245 = vlaneseq
    %v246 = vshrl.u32 %v245, 7
    %v247 = vadd.s32 %v246, 8
    %vm248 = vcmp.lt.s32.totalorder %v246, 0
    %v249 = vsub.s32 0, %v246
    %v250 = vsel %vm248, %v249, %v246
    %v251 = vshrl.u32 %v250, 3
    %v252 = vand.u32 %v250, 7
    %v253 = vsub.s32 0, %v252
    %v254 = vsel %vm248, %v253, %v252
    %vm255 = vcmp.lt.s32.totalorder %v247, 0
    %v256 = vsub.s32 0, %v247
    %v257 = vsel %vm255, %v256, %v247
    %v258 = vshrl.u32 %v257, 3
    %v259 = vand.u32 %v257, 7
    %v260 = vsub.s32 0, %v259
    %v261 = vsel %vm255, %v260, %v259
    %vm262 = vcmp.ne.s32.totalorder %v254, 0
    %vm263 = vcmp.ne.s32.totalorder %v261, 0
    %vm264 = vcmp.lt.s32.totalorder %v254, 0
    %vm265 = vcmp.lt.s32.totalorder %v261, 0
    %vm266 = vmand %vm264, %vm262
    %vm267 = vmand %vm265, %vm263
    %v268 = vadd.s32 %v254, 8
    %v269 = vadd.s32 %v261, 8
    %v270 = vsel %vm266, %v268, %v254
    %v271 = vsel %vm267, %v269, %v261
    %vm272 = vcmp.ge.s32.totalorder %v270, 1
    %vm273 = vcmp.ge.s32.totalorder %v271, 1
    %vm274 = vcmp.ge.s32.totalorder %v270, 2
    %vm275 = vcmp.ge.s32.totalorder %v271, 2
    %vm276 = vcmp.ge.s32.totalorder %v270, 4
    %vm277 = vcmp.ge.s32.totalorder %v271, 4
    %v278 = vmul.f32 %v237, %v237
    %v279 = vmul.f32 %v242, %v242
    %v280 = vsel %vm163, %v278, 0.0
    %281 = vadd.xlane.f32.xlu0 %v280
    %v282 = vpop.xlane.xlu0 %281
    %v283 = vsel %vm163, %v279, 0.0
    %284 = vadd.xlane.f32.xlu0 %v283
    %v285 = vpop.xlane.xlu0 %284
    %v286 = vrcp.pop 32.0
    %v287 = vmul.f32 %v282, %v286
    %v288 = vmul.f32 %v285, %v286
    %v289 = vadd.f32 %v287, 1e-06
    %v290 = vadd.f32 %v288, 1e-06
    %v291 = vrsqrt.pop %v289
    %v292 = vrsqrt.pop %v290
    %v293 = vmul.f32 %v237, %v291
    %v294 = vmul.f32 %v242, %v292
    %v295 = vld [vmem:[%s3] sm:$0x1]
    %v297 = vlaneseq
    %v298 = vshrl.u32 %v297, 7
    %v299 = vsub.s32 0, %v298
    %v300 = vrot.slane %v295, %v299
    %v302 = vmul.f32 %v293, %v300
    %v303 = vmul.f32 %v294, %v300
    %v304 = vld [vmem:[%s4] sm:$0xff]
    %v305 = vld [vmem:[%s4 + $0x8] sm:$0xff]
    %v306 = vld [vmem:[%s4 + $0x10] sm:$0xff]
    %v307 = vld [vmem:[%s4 + $0x18] sm:$0xff]
    %v308 = vld [vmem:[#allocation8] sm:$0x1]
    %v310 = vlaneseq
    %v311 = vshrl.u32 %v310, 7
    %v312 = vsub.s32 0, %v311
    %v313 = vrot.slane %v308, %v312
    %v316 = vsel %vm163, %v302, 0
    %v319 = vsel %vm163, %v303, 0
    %321 = vmatprep.subr.mxu0 0.0
    %322 = vmatpush1.msra.mxu0 %v304
    %323 = vmatprep.subr.mxu0 0.0
    %324 = vmatpush1.msra.mxu0 %v305
    %325 = vmatprep.subr.mxu0 0.0
    %326 = vmatpush1.msra.mxu0 %v306
    %327 = vmatprep.subr.mxu0 0.0
    %328 = vmatpush1.msra.mxu0 %v307
    %329 = vmatprep.subr.mxu0 0.0
    %330 = vmatpush1.msra.mxu0 0.0
    %331 = vmatprep.subr.mxu0 0.0
    %332 = vmatpush1.msra.mxu0 0.0
    %333 = vmatprep.subr.mxu0 0.0
    %334 = vmatpush1.msra.mxu0 0.0
    %335 = vmatprep.subr.mxu0 0.0
    %336 = vmatpush1.msra.mxu0 0.0
    %337 = vmatprep.subr.mxu0 0.0
    %338 = vmatpush1.msra.mxu0 0.0
    %339 = vmatprep.subr.mxu0 0.0
    %340 = vmatpush1.msra.mxu0 0.0
    %341 = vmatprep.subr.mxu0 0.0
    %342 = vmatpush1.msra.mxu0 0.0
    %343 = vmatprep.subr.mxu0 0.0
    %344 = vmatpush1.msra.mxu0 0.0
    %345 = vmatprep.subr.mxu0 0.0
    %346 = vmatpush1.msra.mxu0 0.0
    %347 = vmatprep.subr.mxu0 0.0
    %348 = vmatpush1.msra.mxu0 0.0
    %349 = vmatprep.subr.mxu0 0.0
    %350 = vmatpush1.msra.mxu0 0.0
    %351 = vmatprep.subr.mxu0 0.0
    %352 = vmatpush1.msra.mxu0 0.0
    %353 = vmatprep.subr.mxu0 0.0
    %354 = vmatpush1.msra.mxu0 0.0
    %355 = vmatprep.subr.mxu0 0.0
    %356 = vmatpush1.msra.mxu0 0.0
    %357 = vmatprep.subr.mxu0 0.0
    %358 = vmatpush1.msra.mxu0 0.0
    %359 = vmatprep.subr.mxu0 0.0
    %360 = vmatpush1.msra.mxu0 0.0
    %361 = vmatprep.subr.mxu0 0.0
    %362 = vmatpush1.msra.mxu0 0.0
    %363 = vmatprep.subr.mxu0 0.0
    %364 = vmatpush1.msra.mxu0 0.0
    %365 = vmatprep.subr.mxu0 0.0
    %366 = vmatpush1.msra.mxu0 0.0
    %367 = vmatprep.subr.mxu0 0.0
    %368 = vmatpush1.msra.mxu0 0.0
    %369 = vmatprep.subr.mxu0 0.0
    %370 = vmatpush1.msra.mxu0 0.0
    %371 = vmatprep.subr.mxu0 0.0
    %372 = vmatpush1.msra.mxu0 0.0
    %373 = vmatprep.subr.mxu0 0.0
    %374 = vmatpush1.msra.mxu0 0.0
    %375 = vmatprep.subr.mxu0 0.0
    %376 = vmatpush1.msra.mxu0 0.0
    %377 = vmatprep.subr.mxu0 0.0
    %378 = vmatpush1.msra.mxu0 0.0
    %379 = vmatprep.subr.mxu0 0.0
    %380 = vmatpush1.msra.mxu0 0.0
    %381 = vmatprep.subr.mxu0 0.0
    %382 = vmatpush1.msra.mxu0 0.0
    %383 = vmatprep.subr.mxu0 0.0
    %384 = vmatpush1.msra.mxu0 0.0
    %385 = vmatprep.mubr.f32.mxu0 0.0
    %386 = vmatmul.mubr.f32.gmra.mrb[0].mxu0 %v316
    %v387 = vpop.f32.mrb[0].mxu0
    %v388 = vadd.f32 %v313, %v387
    %v389 = vpop.f32.mrb[0].mxu0
    %390 = vmatprep.mubr.f32.mxu0 0.0
    %391 = vmatmul.mubr.f32.gmra.mrb[0].mxu0 %v319
    %v392 = vpop.f32.mrb[0].mxu0
    %v393 = vadd.f32 %v313, %v392
    %v394 = vpop.f32.mrb[0].mxu0
    %395 = vdwg.mxu0
    %v396 = vld [vmem:[%s6] sm:$0xff]
    %v397 = vld [vmem:[%s6 + $0x8] sm:$0xff]
    %v398 = vld [vmem:[%s6 + $0x10] sm:$0xff]
    %v399 = vld [vmem:[%s6 + $0x18] sm:$0xff]
    %v400 = vld [vmem:[#allocation10] sm:$0x1]
    %v402 = vlaneseq
    %v403 = vshrl.u32 %v402, 7
    %v404 = vsub.s32 0, %v403
    %v405 = vrot.slane %v400, %v404
    %407 = vmatprep.subr.mxu0 0.0
    %408 = vmatpush1.msra.mxu0 %v396
    %409 = vmatprep.subr.mxu0 0.0
    %410 = vmatpush1.msra.mxu0 %v397
    %411 = vmatprep.subr.mxu0 0.0
    %412 = vmatpush1.msra.mxu0 %v398
    %413 = vmatprep.subr.mxu0 0.0
    %414 = vmatpush1.msra.mxu0 %v399
    %415 = vmatprep.subr.mxu0 0.0
    %416 = vmatpush1.msra.mxu0 0.0
    %417 = vmatprep.subr.mxu0 0.0
    %418 = vmatpush1.msra.mxu0 0.0
    %419 = vmatprep.subr.mxu0 0.0
    %420 = vmatpush1.msra.mxu0 0.0
    %421 = vmatprep.subr.mxu0 0.0
    %422 = vmatpush1.msra.mxu0 0.0
    %423 = vmatprep.subr.mxu0 0.0
    %424 = vmatpush1.msra.mxu0 0.0
    %425 = vmatprep.subr.mxu0 0.0
    %426 = vmatpush1.msra.mxu0 0.0
    %427 = vmatprep.subr.mxu0 0.0
    %428 = vmatpush1.msra.mxu0 0.0
    %429 = vmatprep.subr.mxu0 0.0
    %430 = vmatpush1.msra.mxu0 0.0
    %431 = vmatprep.subr.mxu0 0.0
    %432 = vmatpush1.msra.mxu0 0.0
    %433 = vmatprep.subr.mxu0 0.0
    %434 = vmatpush1.msra.mxu0 0.0
    %435 = vmatprep.subr.mxu0 0.0
    %436 = vmatpush1.msra.mxu0 0.0
    %437 = vmatprep.subr.mxu0 0.0
    %438 = vmatpush1.msra.mxu0 0.0
    %439 = vmatprep.subr.mxu0 0.0
    %440 = vmatpush1.msra.mxu0 0.0
    %441 = vmatprep.subr.mxu0 0.0
    %442 = vmatpush1.msra.mxu0 0.0
    %443 = vmatprep.subr.mxu0 0.0
    %444 = vmatpush1.msra.mxu0 0.0
    %445 = vmatprep.subr.mxu0 0.0
    %446 = vmatpush1.msra.mxu0 0.0
    %447 = vmatprep.subr.mxu0 0.0
    %448 = vmatpush1.msra.mxu0 0.0
    %449 = vmatprep.subr.mxu0 0.0
    %450 = vmatpush1.msra.mxu0 0.0
    %451 = vmatprep.subr.mxu0 0.0
    %452 = vmatpush1.msra.mxu0 0.0
    %453 = vmatprep.subr.mxu0 0.0
    %454 = vmatpush1.msra.mxu0 0.0
    %455 = vmatprep.subr.mxu0 0.0
    %456 = vmatpush1.msra.mxu0 0.0
    %457 = vmatprep.subr.mxu0 0.0
    %458 = vmatpush1.msra.mxu0 0.0
    %459 = vmatprep.subr.mxu0 0.0
    %460 = vmatpush1.msra.mxu0 0.0
    %461 = vmatprep.subr.mxu0 0.0
    %462 = vmatpush1.msra.mxu0 0.0
    %463 = vmatprep.subr.mxu0 0.0
    %464 = vmatpush1.msra.mxu0 0.0
    %465 = vmatprep.subr.mxu0 0.0
    %466 = vmatpush1.msra.mxu0 0.0
    %467 = vmatprep.subr.mxu0 0.0
    %468 = vmatpush1.msra.mxu0 0.0
    %469 = vmatprep.subr.mxu0 0.0
    %470 = vmatpush1.msra.mxu0 0.0
    %471 = vmatprep.mubr.f32.mxu0 0.0
    %472 = vmatmul.mubr.f32.gmra.mrb[0].mxu0 %v316
    %v473 = vpop.f32.mrb[0].mxu0
    %v474 = vadd.f32 %v405, %v473
    %v475 = vpop.f32.mrb[0].mxu0
    %476 = vmatprep.mubr.f32.mxu0 0.0
    %477 = vmatmul.mubr.f32.gmra.mrb[0].mxu0 %v319
    %v478 = vpop.f32.mrb[0].mxu0
    %v479 = vadd.f32 %v405, %v478
    %v480 = vpop.f32.mrb[0].mxu0
    %481 = vdwg.mxu0
    %v482 = vld [vmem:[%s8] sm:$0xff]
    %v483 = vld [vmem:[%s8 + $0x8] sm:$0xff]
    %v484 = vld [vmem:[%s8 + $0x10] sm:$0xff]
    %v485 = vld [vmem:[%s8 + $0x18] sm:$0xff]
    %v486 = vld [vmem:[#allocation11] sm:$0x1]
    %v488 = vlaneseq
    %v489 = vshrl.u32 %v488, 7
    %v490 = vsub.s32 0, %v489
    %v491 = vrot.slane %v486, %v490
    %493 = vmatprep.subr.mxu0 0.0
    %494 = vmatpush1.msra.mxu0 %v482
    %495 = vmatprep.subr.mxu0 0.0
    %496 = vmatpush1.msra.mxu0 %v483
    %497 = vmatprep.subr.mxu0 0.0
    %498 = vmatpush1.msra.mxu0 %v484
    %499 = vmatprep.subr.mxu0 0.0
    %500 = vmatpush1.msra.mxu0 %v485
    %501 = vmatprep.subr.mxu0 0.0
    %502 = vmatpush1.msra.mxu0 0.0
    %503 = vmatprep.subr.mxu0 0.0
    %504 = vmatpush1.msra.mxu0 0.0
    %505 = vmatprep.subr.mxu0 0.0
    %506 = vmatpush1.msra.mxu0 0.0
    %507 = vmatprep.subr.mxu0 0.0
    %508 = vmatpush1.msra.mxu0 0.0
    %509 = vmatprep.subr.mxu0 0.0
    %510 = vmatpush1.msra.mxu0 0.0
    %511 = vmatprep.subr.mxu0 0.0
    %512 = vmatpush1.msra.mxu0 0.0
    %513 = vmatprep.subr.mxu0 0.0
    %514 = vmatpush1.msra.mxu0 0.0
    %515 = vmatprep.subr.mxu0 0.0
    %516 = vmatpush1.msra.mxu0 0.0
    %517 = vmatprep.subr.mxu0 0.0
    %518 = vmatpush1.msra.mxu0 0.0
    %519 = vmatprep.subr.mxu0 0.0
    %520 = vmatpush1.msra.mxu0 0.0
    %521 = vmatprep.subr.mxu0 0.0
    %522 = vmatpush1.msra.mxu0 0.0
    %523 = vmatprep.subr.mxu0 0.0
    %524 = vmatpush1.msra.mxu0 0.0
    %525 = vmatprep.subr.mxu0 0.0
    %526 = vmatpush1.msra.mxu0 0.0
    %527 = vmatprep.subr.mxu0 0.0
    %528 = vmatpush1.msra.mxu0 0.0
    %529 = vmatprep.subr.mxu0 0.0
    %530 = vmatpush1.msra.mxu0 0.0
    %531 = vmatprep.subr.mxu0 0.0
    %532 = vmatpush1.msra.mxu0 0.0
    %533 = vmatprep.subr.mxu0 0.0
    %534 = vmatpush1.msra.mxu0 0.0
    %535 = vmatprep.subr.mxu0 0.0
    %536 = vmatpush1.msra.mxu0 0.0
    %537 = vmatprep.subr.mxu0 0.0
    %538 = vmatpush1.msra.mxu0 0.0
    %539 = vmatprep.subr.mxu0 0.0
    %540 = vmatpush1.msra.mxu0 0.0
    %541 = vmatprep.subr.mxu0 0.0
    %542 = vmatpush1.msra.mxu0 0.0
    %543 = vmatprep.subr.mxu0 0.0
    %544 = vmatpush1.msra.mxu0 0.0
    %545 = vmatprep.subr.mxu0 0.0
    %546 = vmatpush1.msra.mxu0 0.0
    %547 = vmatprep.subr.mxu0 0.0
    %548 = vmatpush1.msra.mxu0 0.0
    %549 = vmatprep.subr.mxu0 0.0
    %550 = vmatpush1.msra.mxu0 0.0
    %551 = vmatprep.subr.mxu0 0.0
    %552 = vmatpush1.msra.mxu0 0.0
    %553 = vmatprep.subr.mxu0 0.0
    %554 = vmatpush1.msra.mxu0 0.0
    %555 = vmatprep.subr.mxu0 0.0
    %556 = vmatpush1.msra.mxu0 0.0
    %557 = vmatprep.mubr.f32.mxu0 0.0
    %558 = vmatmul.mubr.f32.gmra.mrb[0].mxu0 %v316
    %v559 = vpop.f32.mrb[0].mxu0
    %v560 = vadd.f32 %v491, %v559
    %v561 = vpop.f32.mrb[0].mxu0
    %562 = vmatprep.mubr.f32.mxu0 0.0
    %563 = vmatmul.mubr.f32.gmra.mrb[0].mxu0 %v319
    %v564 = vpop.f32.mrb[0].mxu0
    %v565 = vadd.f32 %v491, %v564
    %v566 = vpop.f32.mrb[0].mxu0
    %567 = vdwg.mxu0
    %v568 = vmax.f32 %v560, 0.0
    %v569 = vmax.f32 %v565, 0.0
    %v570 = vand.u32 2147483647, %v560
    %v571 = vand.u32 2147483647, %v565
    %v572 = vsub.f32 0.0, %v570
    %v573 = vsub.f32 0.0, %v571
    %v574 = vmul.f32 %v572, 1.442695
    %v575 = vpow.pop %v574
    %v576 = vmul.f32 %v573, 1.442695
    %v577 = vpow.pop %v576
    %v578 = vadd.f32 %v575, 1.0
    %v579 = vadd.f32 %v577, 1.0
    %v580 = vlog2.pop %v578
    %v581 = vmul.f32 %v580, 0.6931472
    %v582 = vlog2.pop %v579
    %v583 = vmul.f32 %v582, 0.6931472
    %v584 = vadd.f32 %v568, %v581
    %v585 = vadd.f32 %v569, %v583
    %v586 = vld [vmem:[%s10] sm:$0x1]
    %v587 = vsub.f32 0.0, %v584
    %v588 = vsub.f32 0.0, %v585
    %v590 = vlaneseq
    %v591 = vshrl.u32 %v590, 7
    %v592 = vsub.s32 0, %v591
    %v593 = vrot.slane %v586, %v592
    %v595 = vmul.f32 %v587, %v593
    %v596 = vmul.f32 %v588, %v593
    %v597 = vmul.f32 %v595, 1.442695
    %v598 = vpow.pop %v597
    %v599 = vmul.f32 %v596, 1.442695
    %v600 = vpow.pop %v599
    %v601 = vmul.f32 %v584, %v388
    %v602 = vmul.f32 %v585, %v393
    %v603 = vrot.slane %v598, 7
    %v604 = vrot.slane %v600, 7
    %vm605 = vcmp.lt.s32.totalorder %v246, 1
    %v606 = vsel %vm605, %v603, %v604
    %v607 = vsel %vm605, %v604, %v603
    %v608 = vsel %vm272, %v607, 1.0
    %v609 = vsel %vm273, %v606, 1.0
    %v610 = vrot.slane %v601, 7
    %v611 = vrot.slane %v602, 7
    %v612 = vsel %vm605, %v610, %v611
    %v613 = vsel %vm605, %v611, %v610
    %v614 = vsel %vm272, %v613, 0.0
    %v615 = vsel %vm273, %v612, 0.0
    %v616 = vmul.f32 %v598, %v614
    %v617 = vmul.f32 %v600, %v615
    %v618 = vadd.f32 %v616, %v601
    %v619 = vadd.f32 %v617, %v602
    %v620 = vmul.f32 %v598, %v608
    %v621 = vmul.f32 %v600, %v609
    %v622 = vrot.slane %v620, 6
    %v623 = vrot.slane %v621, 6
    %vm624 = vcmp.lt.s32.totalorder %v246, 2
    %v625 = vsel %vm624, %v622, %v623
    %v626 = vsel %vm624, %v623, %v622
    %v627 = vsel %vm274, %v626, 1.0
    %v628 = vsel %vm275, %v625, 1.0
    %v629 = vrot.slane %v618, 6
    %v630 = vrot.slane %v619, 6
    %v631 = vsel %vm624, %v629, %v630
    %v632 = vsel %vm624, %v630, %v629
    %v633 = vsel %vm274, %v632, 0.0
    %v634 = vsel %vm275, %v631, 0.0
    %v635 = vmul.f32 %v620, %v633
    %v636 = vmul.f32 %v621, %v634
    %v637 = vadd.f32 %v635, %v618
    %v638 = vadd.f32 %v636, %v619
    %v639 = vmul.f32 %v620, %v627
    %v640 = vmul.f32 %v621, %v628
    %v641 = vrot.slane %v637, 4
    %v642 = vrot.slane %v638, 4
    %vm643 = vcmp.lt.s32.totalorder %v246, 4
    %v644 = vsel %vm643, %v641, %v642
    %v645 = vsel %vm643, %v642, %v641
    %v646 = vsel %vm276, %v645, 0.0
    %v647 = vsel %vm277, %v644, 0.0
    %v648 = vmul.f32 %v639, %v646
    %v649 = vmul.f32 %v640, %v647
    %v650 = vadd.f32 %v648, %v637
    %v651 = vadd.f32 %v649, %v638
    %v652 = vld [vmem:[%s11] sm:$0x1]
    %v654 = vlaneseq
    %v655 = vshrl.u32 %v654, 7
    %v656 = vsub.s32 0, %v655
    %v657 = vrot.slane %v652, %v656
    %v659 = vmul.f32 %v657, %v388
    %v660 = vmul.f32 %v657, %v393
    %v661 = vadd.f32 %v650, %v659
    %v662 = vadd.f32 %v651, %v660
    %v663 = vsub.f32 0.0, %v474
    %v664 = vsub.f32 0.0, %v479
    %v665 = vmul.f32 %v663, 1.442695
    %v666 = vpow.pop %v665
    %v667 = vmul.f32 %v664, 1.442695
    %v668 = vpow.pop %v667
    %v669 = vadd.f32 %v666, 1.0
    %v670 = vadd.f32 %v668, 1.0
    %v671 = vrcp.pop %v669
    %v672 = vmul.f32 1.0, %v671
    %v673 = vrcp.pop %v670
    %v674 = vmul.f32 1.0, %v673
    %v675 = vmul.f32 %v474, %v672
    %v676 = vmul.f32 %v479, %v674
    %v677 = vmul.f32 %v661, %v675
    %v678 = vmul.f32 %v662, %v676
    %v679 = vld [vmem:[%s12] sm:$0xff]
    %v680 = vld [vmem:[%s12 + $0x8] sm:$0xff]
    %v681 = vld [vmem:[%s12 + $0x10] sm:$0xff]
    %v682 = vld [vmem:[%s12 + $0x18] sm:$0xff]
    %v683 = vld [vmem:[%s12 + $0x20] sm:$0xff]
    %v684 = vld [vmem:[%s12 + $0x28] sm:$0xff]
    %v685 = vld [vmem:[%s12 + $0x30] sm:$0xff]
    %v686 = vld [vmem:[%s12 + $0x38] sm:$0xff]
    %vm687 = vcmask 523264
    %v689 = vsel %vm687, %v677, 0
    %v692 = vsel %vm687, %v678, 0
    %694 = vmatprep.subr.mxu0 0.0
    %695 = vmatpush1.msra.mxu0 %v679
    %696 = vmatprep.subr.mxu0 0.0
    %697 = vmatpush1.msra.mxu0 %v680
    %698 = vmatprep.subr.mxu0 0.0
    %699 = vmatpush1.msra.mxu0 %v681
    %700 = vmatprep.subr.mxu0 0.0
    %701 = vmatpush1.msra.mxu0 %v682
    %702 = vmatprep.subr.mxu0 0.0
    %703 = vmatpush1.msra.mxu0 %v683
    %704 = vmatprep.subr.mxu0 0.0
    %705 = vmatpush1.msra.mxu0 %v684
    %706 = vmatprep.subr.mxu0 0.0
    %707 = vmatpush1.msra.mxu0 %v685
    %708 = vmatprep.subr.mxu0 0.0
    %709 = vmatpush1.msra.mxu0 %v686
    %710 = vmatprep.subr.mxu0 0.0
    %711 = vmatpush1.msra.mxu0 0.0
    %712 = vmatprep.subr.mxu0 0.0
    %713 = vmatpush1.msra.mxu0 0.0
    %714 = vmatprep.subr.mxu0 0.0
    %715 = vmatpush1.msra.mxu0 0.0
    %716 = vmatprep.subr.mxu0 0.0
    %717 = vmatpush1.msra.mxu0 0.0
    %718 = vmatprep.subr.mxu0 0.0
    %719 = vmatpush1.msra.mxu0 0.0
    %720 = vmatprep.subr.mxu0 0.0
    %721 = vmatpush1.msra.mxu0 0.0
    %722 = vmatprep.subr.mxu0 0.0
    %723 = vmatpush1.msra.mxu0 0.0
    %724 = vmatprep.subr.mxu0 0.0
    %725 = vmatpush1.msra.mxu0 0.0
    %726 = vmatprep.subr.mxu0 0.0
    %727 = vmatpush1.msra.mxu0 0.0
    %728 = vmatprep.subr.mxu0 0.0
    %729 = vmatpush1.msra.mxu0 0.0
    %730 = vmatprep.subr.mxu0 0.0
    %731 = vmatpush1.msra.mxu0 0.0
    %732 = vmatprep.subr.mxu0 0.0
    %733 = vmatpush1.msra.mxu0 0.0
    %734 = vmatprep.subr.mxu0 0.0
    %735 = vmatpush1.msra.mxu0 0.0
    %736 = vmatprep.subr.mxu0 0.0
    %737 = vmatpush1.msra.mxu0 0.0
    %738 = vmatprep.subr.mxu0 0.0
    %739 = vmatpush1.msra.mxu0 0.0
    %740 = vmatprep.subr.mxu0 0.0
    %741 = vmatpush1.msra.mxu0 0.0
    %742 = vmatprep.subr.mxu0 0.0
    %743 = vmatpush1.msra.mxu0 0.0
    %744 = vmatprep.subr.mxu0 0.0
    %745 = vmatpush1.msra.mxu0 0.0
    %746 = vmatprep.subr.mxu0 0.0
    %747 = vmatpush1.msra.mxu0 0.0
    %748 = vmatprep.subr.mxu0 0.0
    %749 = vmatpush1.msra.mxu0 0.0
    %750 = vmatprep.subr.mxu0 0.0
    %751 = vmatpush1.msra.mxu0 0.0
    %752 = vmatprep.subr.mxu0 0.0
    %753 = vmatpush1.msra.mxu0 0.0
    %754 = vmatprep.subr.mxu0 0.0
    %755 = vmatpush1.msra.mxu0 0.0
    %756 = vmatprep.subr.mxu0 0.0
    %757 = vmatpush1.msra.mxu0 0.0
    %758 = vmatprep.mubr.f32.mxu0 0.0
    %759 = vmatmul.mubr.f32.gmra.mrb[0].mxu0 %v689
    %v760 = vpop.f32.mrb[0].mxu0
    %v761 = vadd.f32 0.0, %v760
    %v762 = vpop.f32.mrb[0].mxu0
    %763 = vmatprep.mubr.f32.mxu0 0.0
    %764 = vmatmul.mubr.f32.gmra.mrb[0].mxu0 %v692
    %v765 = vpop.f32.mrb[0].mxu0
    %v766 = vadd.f32 0.0, %v765
    %v767 = vpop.f32.mrb[0].mxu0
    %768 = vdwg.mxu0
    %v769 = vadd.f32 %v237, %v761
    %v770 = vadd.f32 %v242, %v766
    %v771 = vld [vmem:[%s13] sm:$0x1]
    %v773 = vlaneseq
    %v774 = vshrl.u32 %v773, 7
    %v775 = vsub.s32 0, %v774
    %v776 = vrot.slane %v771, %v775
    %v778 = vadd.f32 %v769, %v776
    %v779 = vadd.f32 %v770, %v776
    %v780 = vmul.f32 %v778, %v778
    %v781 = vmul.f32 %v779, %v779
    %v782 = vsel %vm163, %v780, 0.0
    %783 = vadd.xlane.f32.xlu0 %v782
    %v784 = vpop.xlane.xlu0 %783
    %v785 = vsel %vm163, %v781, 0.0
    %786 = vadd.xlane.f32.xlu0 %v785
    %v787 = vpop.xlane.xlu0 %786
    %v788 = vmul.f32 %v784, %v286
    %v789 = vmul.f32 %v787, %v286
    %v790 = vadd.f32 %v788, 1e-06
    %v791 = vadd.f32 %v789, 1e-06
    %v792 = vrsqrt.pop %v790
    %v793 = vrsqrt.pop %v791
    %v794 = vmul.f32 %v778, %v792
    %v795 = vmul.f32 %v779, %v793
    %s796 = scalar_lea.vmem %s3, 1
    %v797 = vld [vmem:[%s796] sm:$0x1]
    %v799 = vlaneseq
    %v800 = vshrl.u32 %v799, 7
    %v801 = vsub.s32 0, %v800
    %v802 = vrot.slane %v797, %v801
    %v804 = vmul.f32 %v794, %v802
    %v805 = vmul.f32 %v795, %v802
    %s806 = scalar_lea.vmem %s4, 32
    %v807 = vld [vmem:[%s806] sm:$0xff]
    %v808 = vld [vmem:[%s806 + $0x8] sm:$0xff]
    %v809 = vld [vmem:[%s806 + $0x10] sm:$0xff]
    %v810 = vld [vmem:[%s806 + $0x18] sm:$0xff]
    %s811 = scalar_lea.vmem [#allocation8], 1
    %v812 = vld [vmem:[%s811] sm:$0x1]
    %v814 = vlaneseq
    %v815 = vshrl.u32 %v814, 7
    %v816 = vsub.s32 0, %v815
    %v817 = vrot.slane %v812, %v816
    %v820 = vsel %vm163, %v804, 0
    %v823 = vsel %vm163, %v805, 0
    %825 = vmatprep.subr.mxu0 0.0
    %826 = vmatpush1.msra.mxu0 %v807
    %827 = vmatprep.subr.mxu0 0.0
    %828 = vmatpush1.msra.mxu0 %v808
    %829 = vmatprep.subr.mxu0 0.0
    %830 = vmatpush1.msra.mxu0 %v809
    %831 = vmatprep.subr.mxu0 0.0
    %832 = vmatpush1.msra.mxu0 %v810
    %833 = vmatprep.subr.mxu0 0.0
    %834 = vmatpush1.msra.mxu0 0.0
    %835 = vmatprep.subr.mxu0 0.0
    %836 = vmatpush1.msra.mxu0 0.0
    %837 = vmatprep.subr.mxu0 0.0
    %838 = vmatpush1.msra.mxu0 0.0
    %839 = vmatprep.subr.mxu0 0.0
    %840 = vmatpush1.msra.mxu0 0.0
    %841 = vmatprep.subr.mxu0 0.0
    %842 = vmatpush1.msra.mxu0 0.0
    %843 = vmatprep.subr.mxu0 0.0
    %844 = vmatpush1.msra.mxu0 0.0
    %845 = vmatprep.subr.mxu0 0.0
    %846 = vmatpush1.msra.mxu0 0.0
    %847 = vmatprep.subr.mxu0 0.0
    %848 = vmatpush1.msra.mxu0 0.0
    %849 = vmatprep.subr.mxu0 0.0
    %850 = vmatpush1.msra.mxu0 0.0
    %851 = vmatprep.subr.mxu0 0.0
    %852 = vmatpush1.msra.mxu0 0.0
    %853 = vmatprep.subr.mxu0 0.0
    %854 = vmatpush1.msra.mxu0 0.0
    %855 = vmatprep.subr.mxu0 0.0
    %856 = vmatpush1.msra.mxu0 0.0
    %857 = vmatprep.subr.mxu0 0.0
    %858 = vmatpush1.msra.mxu0 0.0
    %859 = vmatprep.subr.mxu0 0.0
    %860 = vmatpush1.msra.mxu0 0.0
    %861 = vmatprep.subr.mxu0 0.0
    %862 = vmatpush1.msra.mxu0 0.0
    %863 = vmatprep.subr.mxu0 0.0
    %864 = vmatpush1.msra.mxu0 0.0
    %865 = vmatprep.subr.mxu0 0.0
    %866 = vmatpush1.msra.mxu0 0.0
    %867 = vmatprep.subr.mxu0 0.0
    %868 = vmatpush1.msra.mxu0 0.0
    %869 = vmatprep.subr.mxu0 0.0
    %870 = vmatpush1.msra.mxu0 0.0
    %871 = vmatprep.subr.mxu0 0.0
    %872 = vmatpush1.msra.mxu0 0.0
    %873 = vmatprep.subr.mxu0 0.0
    %874 = vmatpush1.msra.mxu0 0.0
    %875 = vmatprep.subr.mxu0 0.0
    %876 = vmatpush1.msra.mxu0 0.0
    %877 = vmatprep.subr.mxu0 0.0
    %878 = vmatpush1.msra.mxu0 0.0
    %879 = vmatprep.subr.mxu0 0.0
    %880 = vmatpush1.msra.mxu0 0.0
    %881 = vmatprep.subr.mxu0 0.0
    %882 = vmatpush1.msra.mxu0 0.0
    %883 = vmatprep.subr.mxu0 0.0
    %884 = vmatpush1.msra.mxu0 0.0
    %885 = vmatprep.subr.mxu0 0.0
    %886 = vmatpush1.msra.mxu0 0.0
    %887 = vmatprep.subr.mxu0 0.0
    %888 = vmatpush1.msra.mxu0 0.0
    %889 = vmatprep.mubr.f32.mxu0 0.0
    %890 = vmatmul.mubr.f32.gmra.mrb[0].mxu0 %v820
    %v891 = vpop.f32.mrb[0].mxu0
    %v892 = vadd.f32 %v817, %v891
    %v893 = vpop.f32.mrb[0].mxu0
    %894 = vmatprep.mubr.f32.mxu0 0.0
    %895 = vmatmul.mubr.f32.gmra.mrb[0].mxu0 %v823
    %v896 = vpop.f32.mrb[0].mxu0
    %v897 = vadd.f32 %v817, %v896
    %v898 = vpop.f32.mrb[0].mxu0
    %899 = vdwg.mxu0
    %s900 = scalar_lea.vmem %s6, 32
    %v901 = vld [vmem:[%s900] sm:$0xff]
    %v902 = vld [vmem:[%s900 + $0x8] sm:$0xff]
    %v903 = vld [vmem:[%s900 + $0x10] sm:$0xff]
    %v904 = vld [vmem:[%s900 + $0x18] sm:$0xff]
    %s905 = scalar_lea.vmem [#allocation10], 1
    %v906 = vld [vmem:[%s905] sm:$0x1]
    %v908 = vlaneseq
    %v909 = vshrl.u32 %v908, 7
    %v910 = vsub.s32 0, %v909
    %v911 = vrot.slane %v906, %v910
    %913 = vmatprep.subr.mxu0 0.0
    %914 = vmatpush1.msra.mxu0 %v901
    %915 = vmatprep.subr.mxu0 0.0
    %916 = vmatpush1.msra.mxu0 %v902
    %917 = vmatprep.subr.mxu0 0.0
    %918 = vmatpush1.msra.mxu0 %v903
    %919 = vmatprep.subr.mxu0 0.0
    %920 = vmatpush1.msra.mxu0 %v904
    %921 = vmatprep.subr.mxu0 0.0
    %922 = vmatpush1.msra.mxu0 0.0
    %923 = vmatprep.subr.mxu0 0.0
    %924 = vmatpush1.msra.mxu0 0.0
    %925 = vmatprep.subr.mxu0 0.0
    %926 = vmatpush1.msra.mxu0 0.0
    %927 = vmatprep.subr.mxu0 0.0
    %928 = vmatpush1.msra.mxu0 0.0
    %929 = vmatprep.subr.mxu0 0.0
    %930 = vmatpush1.msra.mxu0 0.0
    %931 = vmatprep.subr.mxu0 0.0
    %932 = vmatpush1.msra.mxu0 0.0
    %933 = vmatprep.subr.mxu0 0.0
    %934 = vmatpush1.msra.mxu0 0.0
    %935 = vmatprep.subr.mxu0 0.0
    %936 = vmatpush1.msra.mxu0 0.0
    %937 = vmatprep.subr.mxu0 0.0
    %938 = vmatpush1.msra.mxu0 0.0
    %939 = vmatprep.subr.mxu0 0.0
    %940 = vmatpush1.msra.mxu0 0.0
    %941 = vmatprep.subr.mxu0 0.0
    %942 = vmatpush1.msra.mxu0 0.0
    %943 = vmatprep.subr.mxu0 0.0
    %944 = vmatpush1.msra.mxu0 0.0
    %945 = vmatprep.subr.mxu0 0.0
    %946 = vmatpush1.msra.mxu0 0.0
    %947 = vmatprep.subr.mxu0 0.0
    %948 = vmatpush1.msra.mxu0 0.0
    %949 = vmatprep.subr.mxu0 0.0
    %950 = vmatpush1.msra.mxu0 0.0
    %951 = vmatprep.subr.mxu0 0.0
    %952 = vmatpush1.msra.mxu0 0.0
    %953 = vmatprep.subr.mxu0 0.0
    %954 = vmatpush1.msra.mxu0 0.0
    %955 = vmatprep.subr.mxu0 0.0
    %956 = vmatpush1.msra.mxu0 0.0
    %957 = vmatprep.subr.mxu0 0.0
    %958 = vmatpush1.msra.mxu0 0.0
    %959 = vmatprep.subr.mxu0 0.0
    %960 = vmatpush1.msra.mxu0 0.0
    %961 = vmatprep.subr.mxu0 0.0
    %962 = vmatpush1.msra.mxu0 0.0
    %963 = vmatprep.subr.mxu0 0.0
    %964 = vmatpush1.msra.mxu0 0.0
    %965 = vmatprep.subr.mxu0 0.0
    %966 = vmatpush1.msra.mxu0 0.0
    %967 = vmatprep.subr.mxu0 0.0
    %968 = vmatpush1.msra.mxu0 0.0
    %969 = vmatprep.subr.mxu0 0.0
    %970 = vmatpush1.msra.mxu0 0.0
    %971 = vmatprep.subr.mxu0 0.0
    %972 = vmatpush1.msra.mxu0 0.0
    %973 = vmatprep.subr.mxu0 0.0
    %974 = vmatpush1.msra.mxu0 0.0
    %975 = vmatprep.subr.mxu0 0.0
    %976 = vmatpush1.msra.mxu0 0.0
    %977 = vmatprep.mubr.f32.mxu0 0.0
    %978 = vmatmul.mubr.f32.gmra.mrb[0].mxu0 %v820
    %v979 = vpop.f32.mrb[0].mxu0
    %v980 = vadd.f32 %v911, %v979
    %v981 = vpop.f32.mrb[0].mxu0
    %982 = vmatprep.mubr.f32.mxu0 0.0
    %983 = vmatmul.mubr.f32.gmra.mrb[0].mxu0 %v823
    %v984 = vpop.f32.mrb[0].mxu0
    %v985 = vadd.f32 %v911, %v984
    %v986 = vpop.f32.mrb[0].mxu0
    %987 = vdwg.mxu0
    %s988 = scalar_lea.vmem %s8, 32
    %v989 = vld [vmem:[%s988] sm:$0xff]
    %v990 = vld [vmem:[%s988 + $0x8] sm:$0xff]
    %v991 = vld [vmem:[%s988 + $0x10] sm:$0xff]
    %v992 = vld [vmem:[%s988 + $0x18] sm:$0xff]
    %s993 = scalar_lea.vmem [#allocation11], 1
    %v994 = vld [vmem:[%s993] sm:$0x1]
    %v996 = vlaneseq
    %v997 = vshrl.u32 %v996, 7
    %v998 = vsub.s32 0, %v997
    %v999 = vrot.slane %v994, %v998
    %1001 = vmatprep.subr.mxu0 0.0
    %1002 = vmatpush1.msra.mxu0 %v989
    %1003 = vmatprep.subr.mxu0 0.0
    %1004 = vmatpush1.msra.mxu0 %v990
    %1005 = vmatprep.subr.mxu0 0.0
    %1006 = vmatpush1.msra.mxu0 %v991
    %1007 = vmatprep.subr.mxu0 0.0
    %1008 = vmatpush1.msra.mxu0 %v992
    %1009 = vmatprep.subr.mxu0 0.0
    %1010 = vmatpush1.msra.mxu0 0.0
    %1011 = vmatprep.subr.mxu0 0.0
    %1012 = vmatpush1.msra.mxu0 0.0
    %1013 = vmatprep.subr.mxu0 0.0
    %1014 = vmatpush1.msra.mxu0 0.0
    %1015 = vmatprep.subr.mxu0 0.0
    %1016 = vmatpush1.msra.mxu0 0.0
    %1017 = vmatprep.subr.mxu0 0.0
    %1018 = vmatpush1.msra.mxu0 0.0
    %1019 = vmatprep.subr.mxu0 0.0
    %1020 = vmatpush1.msra.mxu0 0.0
    %1021 = vmatprep.subr.mxu0 0.0
    %1022 = vmatpush1.msra.mxu0 0.0
    %1023 = vmatprep.subr.mxu0 0.0
    %1024 = vmatpush1.msra.mxu0 0.0
    %1025 = vmatprep.subr.mxu0 0.0
    %1026 = vmatpush1.msra.mxu0 0.0
    %1027 = vmatprep.subr.mxu0 0.0
    %1028 = vmatpush1.msra.mxu0 0.0
    %1029 = vmatprep.subr.mxu0 0.0
    %1030 = vmatpush1.msra.mxu0 0.0
    %1031 = vmatprep.subr.mxu0 0.0
    %1032 = vmatpush1.msra.mxu0 0.0
    %1033 = vmatprep.subr.mxu0 0.0
    %1034 = vmatpush1.msra.mxu0 0.0
    %1035 = vmatprep.subr.mxu0 0.0
    %1036 = vmatpush1.msra.mxu0 0.0
    %1037 = vmatprep.subr.mxu0 0.0
    %1038 = vmatpush1.msra.mxu0 0.0
    %1039 = vmatprep.subr.mxu0 0.0
    %1040 = vmatpush1.msra.mxu0 0.0
    %1041 = vmatprep.subr.mxu0 0.0
    %1042 = vmatpush1.msra.mxu0 0.0
    %1043 = vmatprep.subr.mxu0 0.0
    %1044 = vmatpush1.msra.mxu0 0.0
    %1045 = vmatprep.subr.mxu0 0.0
    %1046 = vmatpush1.msra.mxu0 0.0
    %1047 = vmatprep.subr.mxu0 0.0
    %1048 = vmatpush1.msra.mxu0 0.0
    %1049 = vmatprep.subr.mxu0 0.0
    %1050 = vmatpush1.msra.mxu0 0.0
    %1051 = vmatprep.subr.mxu0 0.0
    %1052 = vmatpush1.msra.mxu0 0.0
    %1053 = vmatprep.subr.mxu0 0.0
    %1054 = vmatpush1.msra.mxu0 0.0
    %1055 = vmatprep.subr.mxu0 0.0
    %1056 = vmatpush1.msra.mxu0 0.0
    %1057 = vmatprep.subr.mxu0 0.0
    %1058 = vmatpush1.msra.mxu0 0.0
    %1059 = vmatprep.subr.mxu0 0.0
    %1060 = vmatpush1.msra.mxu0 0.0
    %1061 = vmatprep.subr.mxu0 0.0
    %1062 = vmatpush1.msra.mxu0 0.0
    %1063 = vmatprep.subr.mxu0 0.0
    %1064 = vmatpush1.msra.mxu0 0.0
    %1065 = vmatprep.mubr.f32.mxu0 0.0
    %1066 = vmatmul.mubr.f32.gmra.mrb[0].mxu0 %v820
    %v1067 = vpop.f32.mrb[0].mxu0
    %v1068 = vadd.f32 %v999, %v1067
    %v1069 = vpop.f32.mrb[0].mxu0
    %1070 = vmatprep.mubr.f32.mxu0 0.0
    %1071 = vmatmul.mubr.f32.gmra.mrb[0].mxu0 %v823
    %v1072 = vpop.f32.mrb[0].mxu0
    %v1073 = vadd.f32 %v999, %v1072
    %v1074 = vpop.f32.mrb[0].mxu0
    %1075 = vdwg.mxu0
    %v1076 = vmax.f32 %v1068, 0.0
    %v1077 = vmax.f32 %v1073, 0.0
    %v1078 = vand.u32 2147483647, %v1068
    %v1079 = vand.u32 2147483647, %v1073
    %v1080 = vsub.f32 0.0, %v1078
    %v1081 = vsub.f32 0.0, %v1079
    %v1082 = vmul.f32 %v1080, 1.442695
    %v1083 = vpow.pop %v1082
    %v1084 = vmul.f32 %v1081, 1.442695
    %v1085 = vpow.pop %v1084
    %v1086 = vadd.f32 %v1083, 1.0
    %v1087 = vadd.f32 %v1085, 1.0
    %v1088 = vlog2.pop %v1086
    %v1089 = vmul.f32 %v1088, 0.6931472
    %v1090 = vlog2.pop %v1087
    %v1091 = vmul.f32 %v1090, 0.6931472
    %v1092 = vadd.f32 %v1076, %v1089
    %v1093 = vadd.f32 %v1077, %v1091
    %s1094 = scalar_lea.vmem %s10, 1
    %v1095 = vld [vmem:[%s1094] sm:$0x1]
    %v1096 = vsub.f32 0.0, %v1092
    %v1097 = vsub.f32 0.0, %v1093
    %v1099 = vlaneseq
    %v1100 = vshrl.u32 %v1099, 7
    %v1101 = vsub.s32 0, %v1100
    %v1102 = vrot.slane %v1095, %v1101
    %v1104 = vmul.f32 %v1096, %v1102
    %v1105 = vmul.f32 %v1097, %v1102
    %v1106 = vmul.f32 %v1104, 1.442695
    %v1107 = vpow.pop %v1106
    %v1108 = vmul.f32 %v1105, 1.442695
    %v1109 = vpow.pop %v1108
    %v1110 = vmul.f32 %v1092, %v892
    %v1111 = vmul.f32 %v1093, %v897
    %v1112 = vrot.slane %v1107, 7
    %v1113 = vrot.slane %v1109, 7
    %v1114 = vsel %vm605, %v1112, %v1113
    %v1115 = vsel %vm605, %v1113, %v1112
    %v1116 = vsel %vm272, %v1115, 1.0
    %v1117 = vsel %vm273, %v1114, 1.0
    %v1118 = vrot.slane %v1110, 7
    %v1119 = vrot.slane %v1111, 7
    %v1120 = vsel %vm605, %v1118, %v1119
    %v1121 = vsel %vm605, %v1119, %v1118
    %v1122 = vsel %vm272, %v1121, 0.0
    %v1123 = vsel %vm273, %v1120, 0.0
    %v1124 = vmul.f32 %v1107, %v1122
    %v1125 = vmul.f32 %v1109, %v1123
    %v1126 = vadd.f32 %v1124, %v1110
    %v1127 = vadd.f32 %v1125, %v1111
    %v1128 = vmul.f32 %v1107, %v1116
    %v1129 = vmul.f32 %v1109, %v1117
    %v1130 = vrot.slane %v1128, 6
    %v1131 = vrot.slane %v1129, 6
    %v1132 = vsel %vm624, %v1130, %v1131
    %v1133 = vsel %vm624, %v1131, %v1130
    %v1134 = vsel %vm274, %v1133, 1.0
    %v1135 = vsel %vm275, %v1132, 1.0
    %v1136 = vrot.slane %v1126, 6
    %v1137 = vrot.slane %v1127, 6
    %v1138 = vsel %vm624, %v1136, %v1137
    %v1139 = vsel %vm624, %v1137, %v1136
    %v1140 = vsel %vm274, %v1139, 0.0
    %v1141 = vsel %vm275, %v1138, 0.0
    %v1142 = vmul.f32 %v1128, %v1140
    %v1143 = vmul.f32 %v1129, %v1141
    %v1144 = vadd.f32 %v1142, %v1126
    %v1145 = vadd.f32 %v1143, %v1127
    %v1146 = vmul.f32 %v1128, %v1134
    %v1147 = vmul.f32 %v1129, %v1135
    %v1148 = vrot.slane %v1144, 4
    %v1149 = vrot.slane %v1145, 4
    %v1150 = vsel %vm643, %v1148, %v1149
    %v1151 = vsel %vm643, %v1149, %v1148
    %v1152 = vsel %vm276, %v1151, 0.0
    %v1153 = vsel %vm277, %v1150, 0.0
    %v1154 = vmul.f32 %v1146, %v1152
    %v1155 = vmul.f32 %v1147, %v1153
    %v1156 = vadd.f32 %v1154, %v1144
    %v1157 = vadd.f32 %v1155, %v1145
    %s1158 = scalar_lea.vmem %s11, 1
    %v1159 = vld [vmem:[%s1158] sm:$0x1]
    %v1161 = vlaneseq
    %v1162 = vshrl.u32 %v1161, 7
    %v1163 = vsub.s32 0, %v1162
    %v1164 = vrot.slane %v1159, %v1163
    %v1166 = vmul.f32 %v1164, %v892
    %v1167 = vmul.f32 %v1164, %v897
    %v1168 = vadd.f32 %v1156, %v1166
    %v1169 = vadd.f32 %v1157, %v1167
    %v1170 = vsub.f32 0.0, %v980
    %v1171 = vsub.f32 0.0, %v985
    %v1172 = vmul.f32 %v1170, 1.442695
    %v1173 = vpow.pop %v1172
    %v1174 = vmul.f32 %v1171, 1.442695
    %v1175 = vpow.pop %v1174
    %v1176 = vadd.f32 %v1173, 1.0
    %v1177 = vadd.f32 %v1175, 1.0
    %v1178 = vrcp.pop %v1176
    %v1179 = vmul.f32 1.0, %v1178
    %v1180 = vrcp.pop %v1177
    %v1181 = vmul.f32 1.0, %v1180
    %v1182 = vmul.f32 %v980, %v1179
    %v1183 = vmul.f32 %v985, %v1181
    %v1184 = vmul.f32 %v1168, %v1182
    %v1185 = vmul.f32 %v1169, %v1183
    %s1186 = scalar_lea.vmem %s12, 64
    %v1187 = vld [vmem:[%s1186] sm:$0xff]
    %v1188 = vld [vmem:[%s1186 + $0x8] sm:$0xff]
    %v1189 = vld [vmem:[%s1186 + $0x10] sm:$0xff]
    %v1190 = vld [vmem:[%s1186 + $0x18] sm:$0xff]
    %v1191 = vld [vmem:[%s1186 + $0x20] sm:$0xff]
    %v1192 = vld [vmem:[%s1186 + $0x28] sm:$0xff]
    %v1193 = vld [vmem:[%s1186 + $0x30] sm:$0xff]
    %v1194 = vld [vmem:[%s1186 + $0x38] sm:$0xff]
    %v1196 = vsel %vm687, %v1184, 0
    %v1199 = vsel %vm687, %v1185, 0
    %1201 = vmatprep.subr.mxu0 0.0
    %1202 = vmatpush1.msra.mxu0 %v1187
    %1203 = vmatprep.subr.mxu0 0.0
    %1204 = vmatpush1.msra.mxu0 %v1188
    %1205 = vmatprep.subr.mxu0 0.0
    %1206 = vmatpush1.msra.mxu0 %v1189
    %1207 = vmatprep.subr.mxu0 0.0
    %1208 = vmatpush1.msra.mxu0 %v1190
    %1209 = vmatprep.subr.mxu0 0.0
    %1210 = vmatpush1.msra.mxu0 %v1191
    %1211 = vmatprep.subr.mxu0 0.0
    %1212 = vmatpush1.msra.mxu0 %v1192
    %1213 = vmatprep.subr.mxu0 0.0
    %1214 = vmatpush1.msra.mxu0 %v1193
    %1215 = vmatprep.subr.mxu0 0.0
    %1216 = vmatpush1.msra.mxu0 %v1194
    %1217 = vmatprep.subr.mxu0 0.0
    %1218 = vmatpush1.msra.mxu0 0.0
    %1219 = vmatprep.subr.mxu0 0.0
    %1220 = vmatpush1.msra.mxu0 0.0
    %1221 = vmatprep.subr.mxu0 0.0
    %1222 = vmatpush1.msra.mxu0 0.0
    %1223 = vmatprep.subr.mxu0 0.0
    %1224 = vmatpush1.msra.mxu0 0.0
    %1225 = vmatprep.subr.mxu0 0.0
    %1226 = vmatpush1.msra.mxu0 0.0
    %1227 = vmatprep.subr.mxu0 0.0
    %1228 = vmatpush1.msra.mxu0 0.0
    %1229 = vmatprep.subr.mxu0 0.0
    %1230 = vmatpush1.msra.mxu0 0.0
    %1231 = vmatprep.subr.mxu0 0.0
    %1232 = vmatpush1.msra.mxu0 0.0
    %1233 = vmatprep.subr.mxu0 0.0
    %1234 = vmatpush1.msra.mxu0 0.0
    %1235 = vmatprep.subr.mxu0 0.0
    %1236 = vmatpush1.msra.mxu0 0.0
    %1237 = vmatprep.subr.mxu0 0.0
    %1238 = vmatpush1.msra.mxu0 0.0
    %1239 = vmatprep.subr.mxu0 0.0
    %1240 = vmatpush1.msra.mxu0 0.0
    %1241 = vmatprep.subr.mxu0 0.0
    %1242 = vmatpush1.msra.mxu0 0.0
    %1243 = vmatprep.subr.mxu0 0.0
    %1244 = vmatpush1.msra.mxu0 0.0
    %1245 = vmatprep.subr.mxu0 0.0
    %1246 = vmatpush1.msra.mxu0 0.0
    %1247 = vmatprep.subr.mxu0 0.0
    %1248 = vmatpush1.msra.mxu0 0.0
    %1249 = vmatprep.subr.mxu0 0.0
    %1250 = vmatpush1.msra.mxu0 0.0
    %1251 = vmatprep.subr.mxu0 0.0
    %1252 = vmatpush1.msra.mxu0 0.0
    %1253 = vmatprep.subr.mxu0 0.0
    %1254 = vmatpush1.msra.mxu0 0.0
    %1255 = vmatprep.subr.mxu0 0.0
    %1256 = vmatpush1.msra.mxu0 0.0
    %1257 = vmatprep.subr.mxu0 0.0
    %1258 = vmatpush1.msra.mxu0 0.0
    %1259 = vmatprep.subr.mxu0 0.0
    %1260 = vmatpush1.msra.mxu0 0.0
    %1261 = vmatprep.subr.mxu0 0.0
    %1262 = vmatpush1.msra.mxu0 0.0
    %1263 = vmatprep.subr.mxu0 0.0
    %1264 = vmatpush1.msra.mxu0 0.0
    %1265 = vmatprep.mubr.f32.mxu0 0.0
    %1266 = vmatmul.mubr.f32.gmra.mrb[0].mxu0 %v1196
    %v1267 = vpop.f32.mrb[0].mxu0
    %v1268 = vadd.f32 0.0, %v1267
    %v1269 = vpop.f32.mrb[0].mxu0
    %1270 = vmatprep.mubr.f32.mxu0 0.0
    %1271 = vmatmul.mubr.f32.gmra.mrb[0].mxu0 %v1199
    %v1272 = vpop.f32.mrb[0].mxu0
    %v1273 = vadd.f32 0.0, %v1272
    %v1274 = vpop.f32.mrb[0].mxu0
    %1275 = vdwg.mxu0
    %v1276 = vadd.f32 %v778, %v1268
    %v1277 = vadd.f32 %v779, %v1273
    %s1278 = scalar_lea.vmem %s13, 1
    %v1279 = vld [vmem:[%s1278] sm:$0x1]
    %v1281 = vlaneseq
    %v1282 = vshrl.u32 %v1281, 7
    %v1283 = vsub.s32 0, %v1282
    %v1284 = vrot.slane %v1279, %v1283
    %v1286 = vadd.f32 %v1276, %v1284
    %v1287 = vadd.f32 %v1277, %v1284
    %v1288 = vld [vmem:[%s14] sm:$0xff]
    %v1289 = vld [vmem:[%s14 + $0x8] sm:$0xff]
    %v1290 = vld [vmem:[%s14 + $0x10] sm:$0xff]
    %v1291 = vld [vmem:[%s14 + $0x18] sm:$0xff]
    %v1292 = vld [vmem:[%s15] sm:$0x1]
    %v1294 = vlaneseq
    %v1295 = vshrl.u32 %v1294, 7
    %v1296 = vsub.s32 0, %v1295
    %v1297 = vrot.slane %v1292, %v1296
    %v1300 = vsel %vm163, %v1286, 0
    %v1303 = vsel %vm163, %v1287, 0
    %1305 = vmatprep.subr.mxu0 0.0
    %1306 = vmatpush1.msra.mxu0 %v1288
    %1307 = vmatprep.subr.mxu0 0.0
    %1308 = vmatpush1.msra.mxu0 %v1289
    %1309 = vmatprep.subr.mxu0 0.0
    %1310 = vmatpush1.msra.mxu0 %v1290
    %1311 = vmatprep.subr.mxu0 0.0
    %1312 = vmatpush1.msra.mxu0 %v1291
    %1313 = vmatprep.subr.mxu0 0.0
    %1314 = vmatpush1.msra.mxu0 0.0
    %1315 = vmatprep.subr.mxu0 0.0
    %1316 = vmatpush1.msra.mxu0 0.0
    %1317 = vmatprep.subr.mxu0 0.0
    %1318 = vmatpush1.msra.mxu0 0.0
    %1319 = vmatprep.subr.mxu0 0.0
    %1320 = vmatpush1.msra.mxu0 0.0
    %1321 = vmatprep.subr.mxu0 0.0
    %1322 = vmatpush1.msra.mxu0 0.0
    %1323 = vmatprep.subr.mxu0 0.0
    %1324 = vmatpush1.msra.mxu0 0.0
    %1325 = vmatprep.subr.mxu0 0.0
    %1326 = vmatpush1.msra.mxu0 0.0
    %1327 = vmatprep.subr.mxu0 0.0
    %1328 = vmatpush1.msra.mxu0 0.0
    %1329 = vmatprep.subr.mxu0 0.0
    %1330 = vmatpush1.msra.mxu0 0.0
    %1331 = vmatprep.subr.mxu0 0.0
    %1332 = vmatpush1.msra.mxu0 0.0
    %1333 = vmatprep.subr.mxu0 0.0
    %1334 = vmatpush1.msra.mxu0 0.0
    %1335 = vmatprep.subr.mxu0 0.0
    %1336 = vmatpush1.msra.mxu0 0.0
    %1337 = vmatprep.subr.mxu0 0.0
    %1338 = vmatpush1.msra.mxu0 0.0
    %1339 = vmatprep.subr.mxu0 0.0
    %1340 = vmatpush1.msra.mxu0 0.0
    %1341 = vmatprep.subr.mxu0 0.0
    %1342 = vmatpush1.msra.mxu0 0.0
    %1343 = vmatprep.subr.mxu0 0.0
    %1344 = vmatpush1.msra.mxu0 0.0
    %1345 = vmatprep.subr.mxu0 0.0
    %1346 = vmatpush1.msra.mxu0 0.0
    %1347 = vmatprep.subr.mxu0 0.0
    %1348 = vmatpush1.msra.mxu0 0.0
    %1349 = vmatprep.subr.mxu0 0.0
    %1350 = vmatpush1.msra.mxu0 0.0
    %1351 = vmatprep.subr.mxu0 0.0
    %1352 = vmatpush1.msra.mxu0 0.0
    %1353 = vmatprep.subr.mxu0 0.0
    %1354 = vmatpush1.msra.mxu0 0.0
    %1355 = vmatprep.subr.mxu0 0.0
    %1356 = vmatpush1.msra.mxu0 0.0
    %1357 = vmatprep.subr.mxu0 0.0
    %1358 = vmatpush1.msra.mxu0 0.0
    %1359 = vmatprep.subr.mxu0 0.0
    %1360 = vmatpush1.msra.mxu0 0.0
    %1361 = vmatprep.subr.mxu0 0.0
    %1362 = vmatpush1.msra.mxu0 0.0
    %1363 = vmatprep.subr.mxu0 0.0
    %1364 = vmatpush1.msra.mxu0 0.0
    %1365 = vmatprep.subr.mxu0 0.0
    %1366 = vmatpush1.msra.mxu0 0.0
    %1367 = vmatprep.subr.mxu0 0.0
    %1368 = vmatpush1.msra.mxu0 0.0
    %1369 = vmatprep.mubr.f32.mxu0 0.0
    %1370 = vmatmul.mubr.f32.gmra.mrb[0].mxu0 %v1300
    %v1371 = vpop.f32.mrb[0].mxu0
    %v1372 = vadd.f32 %v1297, %v1371
    %v1373 = vpop.f32.mrb[0].mxu0
    %1374 = vmatprep.mubr.f32.mxu0 0.0
    %1375 = vmatmul.mubr.f32.gmra.mrb[0].mxu0 %v1303
    %v1376 = vpop.f32.mrb[0].mxu0
    %v1377 = vadd.f32 %v1297, %v1376
    %v1378 = vpop.f32.mrb[0].mxu0
    %1379 = vdwg.mxu0
    %v1380 = vsel %vm163, %v1372, -inf
    %1381 = vmax.xlane.f32.xlu0 %v1380
    %v1382 = vpop.xlane.xlu0 %1381
    %v1383 = vsel %vm163, %v1377, -inf
    %1384 = vmax.xlane.f32.xlu0 %v1383
    %v1385 = vpop.xlane.xlu0 %1384
    %v1386 = vsub.f32 %v1372, %v1382
    %v1387 = vsub.f32 %v1377, %v1385
    %v1388 = vmul.f32 %v1386, 1.442695
    %v1389 = vpow.pop %v1388
    %v1390 = vmul.f32 %v1387, 1.442695
    %v1391 = vpow.pop %v1390
    %v1392 = vld [vmem:[#allocation13] sm:$0xff]
    %v1393 = vld [vmem:[#allocation13 + $0x8] sm:$0xff]
    %v1394 = vld [vmem:[#allocation13 + $0x10] sm:$0xff]
    %v1395 = vld [vmem:[#allocation13 + $0x18] sm:$0xff]
    %v1397 = vsel %vm163, %v1389, 0
    %v1400 = vsel %vm163, %v1391, 0
    %1402 = vmatprep.subr.mxu0 0.0
    %1403 = vmatpush1.msra.mxu0 %v1392
    %1404 = vmatprep.subr.mxu0 0.0
    %1405 = vmatpush1.msra.mxu0 %v1393
    %1406 = vmatprep.subr.mxu0 0.0
    %1407 = vmatpush1.msra.mxu0 %v1394
    %1408 = vmatprep.subr.mxu0 0.0
    %1409 = vmatpush1.msra.mxu0 %v1395
    %1410 = vmatprep.subr.mxu0 0.0
    %1411 = vmatpush1.msra.mxu0 0.0
    %1412 = vmatprep.subr.mxu0 0.0
    %1413 = vmatpush1.msra.mxu0 0.0
    %1414 = vmatprep.subr.mxu0 0.0
    %1415 = vmatpush1.msra.mxu0 0.0
    %1416 = vmatprep.subr.mxu0 0.0
    %1417 = vmatpush1.msra.mxu0 0.0
    %1418 = vmatprep.subr.mxu0 0.0
    %1419 = vmatpush1.msra.mxu0 0.0
    %1420 = vmatprep.subr.mxu0 0.0
    %1421 = vmatpush1.msra.mxu0 0.0
    %1422 = vmatprep.subr.mxu0 0.0
    %1423 = vmatpush1.msra.mxu0 0.0
    %1424 = vmatprep.subr.mxu0 0.0
    %1425 = vmatpush1.msra.mxu0 0.0
    %1426 = vmatprep.subr.mxu0 0.0
    %1427 = vmatpush1.msra.mxu0 0.0
    %1428 = vmatprep.subr.mxu0 0.0
    %1429 = vmatpush1.msra.mxu0 0.0
    %1430 = vmatprep.subr.mxu0 0.0
    %1431 = vmatpush1.msra.mxu0 0.0
    %1432 = vmatprep.subr.mxu0 0.0
    %1433 = vmatpush1.msra.mxu0 0.0
    %1434 = vmatprep.subr.mxu0 0.0
    %1435 = vmatpush1.msra.mxu0 0.0
    %1436 = vmatprep.subr.mxu0 0.0
    %1437 = vmatpush1.msra.mxu0 0.0
    %1438 = vmatprep.subr.mxu0 0.0
    %1439 = vmatpush1.msra.mxu0 0.0
    %1440 = vmatprep.subr.mxu0 0.0
    %1441 = vmatpush1.msra.mxu0 0.0
    %1442 = vmatprep.subr.mxu0 0.0
    %1443 = vmatpush1.msra.mxu0 0.0
    %1444 = vmatprep.subr.mxu0 0.0
    %1445 = vmatpush1.msra.mxu0 0.0
    %1446 = vmatprep.subr.mxu0 0.0
    %1447 = vmatpush1.msra.mxu0 0.0
    %1448 = vmatprep.subr.mxu0 0.0
    %1449 = vmatpush1.msra.mxu0 0.0
    %1450 = vmatprep.subr.mxu0 0.0
    %1451 = vmatpush1.msra.mxu0 0.0
    %1452 = vmatprep.subr.mxu0 0.0
    %1453 = vmatpush1.msra.mxu0 0.0
    %1454 = vmatprep.subr.mxu0 0.0
    %1455 = vmatpush1.msra.mxu0 0.0
    %1456 = vmatprep.subr.mxu0 0.0
    %1457 = vmatpush1.msra.mxu0 0.0
    %1458 = vmatprep.subr.mxu0 0.0
    %1459 = vmatpush1.msra.mxu0 0.0
    %1460 = vmatprep.subr.mxu0 0.0
    %1461 = vmatpush1.msra.mxu0 0.0
    %1462 = vmatprep.subr.mxu0 0.0
    %1463 = vmatpush1.msra.mxu0 0.0
    %1464 = vmatprep.subr.mxu0 0.0
    %1465 = vmatpush1.msra.mxu0 0.0
    %1466 = vmatprep.mubr.f32.mxu0 0.0
    %1467 = vmatmul.mubr.f32.gmra.mrb[0].mxu0 %v1397
    %v1468 = vpop.f32.mrb[0].mxu0
    %v1469 = vadd.f32 0.0, %v1468
    %v1470 = vpop.f32.mrb[0].mxu0
    %1471 = vmatprep.mubr.f32.mxu0 0.0
    %1472 = vmatmul.mubr.f32.gmra.mrb[0].mxu0 %v1400
    %v1473 = vpop.f32.mrb[0].mxu0
    %v1474 = vadd.f32 0.0, %v1473
    %v1475 = vpop.f32.mrb[0].mxu0
    %1476 = vdwg.mxu0
    %v1477 = vrcp.pop %v1469
    %v1478 = vmul.f32 %v1389, %v1477
    %v1479 = vrcp.pop %v1474
    %v1480 = vmul.f32 %v1391, %v1479
    %1481 = vst.msk [vmem:[#allocation14] sm:$0xff] %vm163, %v1478
    %1482 = vst.msk [vmem:[#allocation14 + $0x8] sm:$0xff] %vm163, %v1480
    // Predicated region
    $region98: #{tpu_custom_call.1} parent=1 // pred_check
      _
    $region99: #{tpu_custom_call.1} parent=1 // pred_check_branch
      %1484 = sbr.rel (0) target = $region101
    $region100: #{tpu_custom_call.1} parent=1 // pred_region
      %s1486 = ssub.s32 256, 256
      %1487 = vsyncadd [#allocation4], %s1486
      %s1488 = sshll.u32 [#allocation14], 4
      %s1489 = int_to_ptr.vmem [resolvable:$true] %s1488
      %1494 = dma.vmem_to_hbm [thread:$0]  %s1489, 256, %s17, [#allocation4], 128, 128, 8
    $region101: #{tpu_custom_call.1} parent=1 // pred_fallthru
      _
    // Predicated region
    $region102: #{tpu_custom_call.1} parent=1 // pred_check
      _
    $region103: #{tpu_custom_call.1} parent=1 // pred_check_branch
      %1496 = sbr.rel (0) target = $region105
    $region104: #{tpu_custom_call.1} parent=1 // pred_region
      %1497 = dma.done [#allocation4], 256
    $region105: #{tpu_custom_call.1} parent=1 // pred_fallthru
      _
    %1498 = vsyncpa [#allocation3], 1
    %1499 = vsyncpa [#allocation6], 1
    %1500 = vsyncpa [#allocation9], 1
    %1501 = vsyncpa [#allocation12], 1
    %1502 = vsyncpa [#allocation4], 1

</llo_original>
